<compile_context>
chip_gen: v5e
topology: v5e:2x2
jax: 0.10.0
libtpu: 0.0.40
codegen_flags: <defaults>
</compile_context>

<pallas_src>
import functools

import jax
import jax.numpy as jnp
from jax.experimental import pallas as pl
from jax.experimental.pallas import tpu as pltpu

_COMPUTE_DTYPE = jnp.bfloat16
_LN_EPS = 1e-5
_VMEM_LIMIT = 32 * 1024 * 1024


# ---------------------------------------------------------------------------
# small helpers
# ---------------------------------------------------------------------------

def _choose_tile(dim, cap, align):
    """Return (tile, padded_dim).  Full-dim block if it fits under cap,
    otherwise an `align`-multiple tile chosen to minimize padding."""
    if dim <= cap:
        return dim, dim
    best_t, best_pad = align, None
    t = (cap // align) * align
    while t >= align:
        pad = (-dim) % t
        if best_pad is None or pad < best_pad:
            best_t, best_pad = t, pad
            if pad == 0:
                break
        t -= align
    return best_t, dim + best_pad


def _pad2(a, rows, cols):
    pr, pc = rows - a.shape[0], cols - a.shape[1]
    if pr == 0 and pc == 0:
        return a
    return jnp.pad(a, ((0, pr), (0, pc)))


def _gelu_f32(y):
    # TODO(synk): tanh-approx GELU; PyTorch nn.GELU defaults to exact erf.
    return 0.5 * y * (1.0 + jnp.tanh(0.7978845608028654 * (y + 0.044715 * y * y * y)))


def _bytes(*arrs):
    return int(sum(int(a.size) * a.dtype.itemsize for a in arrs))


# ---------------------------------------------------------------------------
# Kernel 1: tiled linear  y = x @ w + b  (+ optional GELU, + optional residual)
# ---------------------------------------------------------------------------

def _linear_kernel(x_ref, w_ref, b_ref, *rest, nk, act, has_res):
    if has_res:
        res_ref, o_ref, acc_ref = rest
    else:
        o_ref, acc_ref = rest
    k = pl.program_id(2)

    @pl.when(k == 0)
    def _():
        acc_ref[...] = jnp.zeros_like(acc_ref)

    acc_ref[...] += jnp.dot(x_ref[...], w_ref[...],
                            preferred_element_type=jnp.float32)

    @pl.when(k == nk - 1)
    def _():
        y = acc_ref[...] + b_ref[...].astype(jnp.float32)
        if act == "gelu":
            y = _gelu_f32(y)
        if has_res:
            y = y + res_ref[...].astype(jnp.float32)
        o_ref[...] = y.astype(o_ref.dtype)


def linear(x, w, b, *, act=None, residual=None, out_dtype=None):
    """x: (M, K), w: (K, N), b: (N,) -> (M, N). bf16 matmul, f32 accumulation."""
    M, K = x.shape
    N = w.shape[1]
    out_dtype = out_dtype or x.dtype

    tm, Mp = _choose_tile(M, 256, 8)
    tk, Kp = _choose_tile(K, 512, 128)
    tn, Np = _choose_tile(N, 512, 128)

    xp = _pad2(x, Mp, Kp).astype(_COMPUTE_DTYPE)
    wp = _pad2(w, Kp, Np).astype(_COMPUTE_DTYPE)
    bp = _pad2(b.reshape(1, N).astype(jnp.float32), 1, Np)

    args = [xp, wp, bp]
    in_specs = [
        pl.BlockSpec((tm, tk), lambda i, j, k: (i, k)),
        pl.BlockSpec((tk, tn), lambda i, j, k: (k, j)),
        pl.BlockSpec((1, tn), lambda i, j, k: (0, j)),
    ]
    if residual is not None:
        rp = _pad2(residual, Mp, Np)
        args.append(rp)
        in_specs.append(pl.BlockSpec((tm, tn), lambda i, j, k: (i, j)))

    grid = (Mp // tm, Np // tn, Kp // tk)
    out = pl.pallas_call(
        functools.partial(_linear_kernel, nk=grid[2], act=act,
                          has_res=residual is not None),
        out_shape=jax.ShapeDtypeStruct((Mp, Np), out_dtype),
        grid=grid,
        in_specs=in_specs,
        out_specs=pl.BlockSpec((tm, tn), lambda i, j, k: (i, j)),
        scratch_shapes=[pltpu.VMEM((tm, tn), jnp.float32)],
        compiler_params=pltpu.CompilerParams(
            dimension_semantics=("parallel", "parallel", "arbitrary"),
            vmem_limit_bytes=_VMEM_LIMIT),
        cost_estimate=pl.CostEstimate(
            flops=2 * Mp * Np * Kp,
            transcendentals=(Mp * Np if act == "gelu" else 0),
            bytes_accessed=_bytes(*args) + Mp * Np * jnp.dtype(out_dtype).itemsize),
    )(*args)
    if (Mp, Np) != (M, N):
        out = out[:M, :N]
    return out


# ---------------------------------------------------------------------------
# Kernel 2: fused LayerNorm + linear  y = LN(x) @ w + b
# (LN result is cached in VMEM scratch at the first N-tile and reused)
# ---------------------------------------------------------------------------

def _ln_linear_kernel(x_ref, g_ref, bt_ref, w_ref, b_ref, o_ref, xn_ref, *, eps):
    @pl.when(pl.program_id(1) == 0)
    def _():
        xf = x_ref[...].astype(jnp.float32)
        mu = jnp.mean(xf, axis=-1, keepdims=True)
        xc = xf - mu
        var = jnp.mean(xc * xc, axis=-1, keepdims=True)
        y = xc * jax.lax.rsqrt(var + eps)
        xn_ref[...] = (y * g_ref[...].astype(jnp.float32)
                       + bt_ref[...].astype(jnp.float32)).astype(xn_ref.dtype)

    y = jnp.dot(xn_ref[...], w_ref[...], preferred_element_type=jnp.float32)
    y = y + b_ref[...].astype(jnp.float32)
    o_ref[...] = y.astype(o_ref.dtype)


def ln_linear(x, g, bt, w, b, *, eps=_LN_EPS, out_dtype=None):
    """x: (M, C) -> LN over C, then @ w (C, N) + b.  C kept whole per tile."""
    M, C = x.shape
    N = w.shape[1]
    out_dtype = out_dtype or x.dtype

    tm, Mp = _choose_tile(M, 256, 8)
    tn, Np = _choose_tile(N, 512, 128)

    xp = _pad2(x, Mp, C).astype(_COMPUTE_DTYPE)
    gp = g.reshape(1, C).astype(jnp.float32)
    btp = bt.reshape(1, C).astype(jnp.float32)
    wp = _pad2(w, C, Np).astype(_COMPUTE_DTYPE)
    bp = _pad2(b.reshape(1, N).astype(jnp.float32), 1, Np)

    grid = (Mp // tm, Np // tn)
    out = pl.pallas_call(
        functools.partial(_ln_linear_kernel, eps=eps),
        out_shape=jax.ShapeDtypeStruct((Mp, Np), out_dtype),
        grid=grid,
        in_specs=[
            pl.BlockSpec((tm, C), lambda i, j: (i, 0)),
            pl.BlockSpec((1, C), lambda i, j: (0, 0)),
            pl.BlockSpec((1, C), lambda i, j: (0, 0)),
            pl.BlockSpec((C, tn), lambda i, j: (0, j)),
            pl.BlockSpec((1, tn), lambda i, j: (0, j)),
        ],
        out_specs=pl.BlockSpec((tm, tn), lambda i, j: (i, j)),
        scratch_shapes=[pltpu.VMEM((tm, C), _COMPUTE_DTYPE)],
        compiler_params=pltpu.CompilerParams(
            dimension_semantics=("parallel", "arbitrary"),
            vmem_limit_bytes=_VMEM_LIMIT),
        cost_estimate=pl.CostEstimate(
            flops=2 * Mp * Np * C,
            transcendentals=0,
            bytes_accessed=_bytes(xp, wp) + Mp * Np * jnp.dtype(out_dtype).itemsize),
    )(xp, gp, btp, wp, bp)
    if (Mp, Np) != (M, N):
        out = out[:M, :N]
    return out


# ---------------------------------------------------------------------------
# Kernel 3: fused MLP block   y = x + fc2(GELU(fc1(LN(x))))
# Grid = (M tiles, hidden tiles).  The (M, 4C) intermediate lives only in VMEM.
# ---------------------------------------------------------------------------

def _mlp_kernel(x_ref, g_ref, bt_ref, w1_ref, b1_ref, w2_ref, b2_ref,
                o_ref, xn_ref, acc_ref, *, nh, eps):
    j = pl.program_id(1)

    @pl.when(j == 0)
    def _():
        xf = x_ref[...].astype(jnp.float32)
        mu = jnp.mean(xf, axis=-1, keepdims=True)
        xc = xf - mu
        var = jnp.mean(xc * xc, axis=-1, keepdims=True)
        y = xc * jax.lax.rsqrt(var + eps)
        xn_ref[...] = (y * g_ref[...].astype(jnp.float32)
                       + bt_ref[...].astype(jnp.float32)).astype(xn_ref.dtype)
        acc_ref[...] = jnp.zeros_like(acc_ref)

    h = jnp.dot(xn_ref[...], w1_ref[...], preferred_element_type=jnp.float32)
    h = _gelu_f32(h + b1_ref[...].astype(jnp.float32))
    acc_ref[...] += jnp.dot(h.astype(xn_ref.dtype), w2_ref[...],
                            preferred_element_type=jnp.float32)

    @pl.when(j == nh - 1)
    def _():
        y = acc_ref[...] + b2_ref[...].astype(jnp.float32) \
            + x_ref[...].astype(jnp.float32)          # residual
        o_ref[...] = y.astype(o_ref.dtype)


def fused_mlp(x, g, bt, w1, b1, w2, b2, *, eps=_LN_EPS, out_dtype=None):
    M, C = x.shape
    Hd = w1.shape[1]
    out_dtype = out_dtype or x.dtype

    tm, Mp = _choose_tile(M, 256, 8)
    th, Hp = _choose_tile(Hd, 512, 128)

    xp = _pad2(x, Mp, C).astype(_COMPUTE_DTYPE)
    gp = g.reshape(1, C).astype(jnp.float32)
    btp = bt.reshape(1, C).astype(jnp.float32)
    w1p = _pad2(w1, C, Hp).astype(_COMPUTE_DTYPE)
    b1p = _pad2(b1.reshape(1, Hd).astype(jnp.float32), 1, Hp)
    w2p = _pad2(w2, Hp, C).astype(_COMPUTE_DTYPE)
    b2p = b2.reshape(1, C).astype(jnp.float32)

    grid = (Mp // tm, Hp // th)
    out = pl.pallas_call(
        functools.partial(_mlp_kernel, nh=grid[1], eps=eps),
        out_shape=jax.ShapeDtypeStruct((Mp, C), out_dtype),
        grid=grid,
        in_specs=[
            pl.BlockSpec((tm, C), lambda i, j: (i, 0)),
            pl.BlockSpec((1, C), lambda i, j: (0, 0)),
            pl.BlockSpec((1, C), lambda i, j: (0, 0)),
            pl.BlockSpec((C, th), lambda i, j: (0, j)),
            pl.BlockSpec((1, th), lambda i, j: (0, j)),
            pl.BlockSpec((th, C), lambda i, j: (j, 0)),
            pl.BlockSpec((1, C), lambda i, j: (0, 0)),
        ],
        out_specs=pl.BlockSpec((tm, C), lambda i, j: (i, 0)),
        scratch_shapes=[pltpu.VMEM((tm, C), _COMPUTE_DTYPE),
                        pltpu.VMEM((tm, C), jnp.float32)],
        compiler_params=pltpu.CompilerParams(
            dimension_semantics=("parallel", "arbitrary"),
            vmem_limit_bytes=_VMEM_LIMIT),
        cost_estimate=pl.CostEstimate(
            flops=4 * Mp * C * Hp,
            transcendentals=Mp * Hp,
            bytes_accessed=_bytes(xp, w1p, w2p) + Mp * C * jnp.dtype(out_dtype).itemsize),
    )(xp, gp, btp, w1p, b1p, w2p, b2p)
    if Mp != M:
        out = out[:M]
    return out


# ---------------------------------------------------------------------------
# Kernel 4: multi-head attention, lane-dense in/out, no host-side transposes.
# Input qkv: (B, S, 3C) ; output: (B, S, C)
# ---------------------------------------------------------------------------

def _attn_kernel(qkv_ref, o_ref, *, n_heads, dh, scale):
    C = n_heads * dh
    qkv = qkv_ref[0]                                   # (S, 3C)
    q = qkv[:, :C] * jnp.asarray(scale, qkv.dtype)     # pre-scale q (S*Dh elems)
    k = qkv[:, C:2 * C]
    v = qkv[:, 2 * C:]

    outs = []
    for h in range(n_heads):                           # static unroll over heads
        sl = slice(h * dh, (h + 1) * dh)
        qh, kh, vh = q[:, sl], k[:, sl], v[:, sl]
        s = jax.lax.dot_general(qh, kh, (((1,), (1,)), ((), ())),
                                preferred_element_type=jnp.float32)   # (S, S)
        s = s - jnp.max(s, axis=-1, keepdims=True)
        p = jnp.exp(s)
        p = p * pl.reciprocal(jnp.sum(p, axis=-1, keepdims=True), approx=True)
        outs.append(jnp.dot(p.astype(vh.dtype), vh,
                            preferred_element_type=jnp.float32))      # (S, Dh)
    o_ref[0] = jnp.concatenate(outs, axis=-1).astype(o_ref.dtype)     # lane-dense


def attention(qkv, n_heads):
    B, S, C3 = qkv.shape
    C = C3 // 3
    dh = C // n_heads
    scale = float(dh) ** -0.5
    return pl.pallas_call(
        functools.partial(_attn_kernel, n_heads=n_heads, dh=dh, scale=scale),
        out_shape=jax.ShapeDtypeStruct((B, S, C), qkv.dtype),
        grid=(B,),
        in_specs=[pl.BlockSpec((1, S, C3), lambda b: (b, 0, 0))],
        out_specs=pl.BlockSpec((1, S, C), lambda b: (b, 0, 0)),
        compiler_params=pltpu.CompilerParams(
            dimension_semantics=("parallel",),
            vmem_limit_bytes=_VMEM_LIMIT),
        cost_estimate=pl.CostEstimate(
            flops=4 * B * S * S * C,
            transcendentals=B * n_heads * S * S,
            bytes_accessed=_bytes(qkv) + B * S * C * qkv.dtype.itemsize),
    )(qkv)


# ---------------------------------------------------------------------------
# Parameter init (deterministic, synthetic)
# ---------------------------------------------------------------------------

def init_params(key, cfg):
    C = cfg["n_embd"]
    L = cfg["n_layers"]
    keys = iter(jax.random.split(key, 16 + 8 * L))

    def nrm(shape, scale=0.02):
        return scale * jax.random.normal(next(keys), shape, dtype=jnp.float32)

    p = {
        "quant_w": nrm((cfg["latent_dim"], C)),          # nn.Linear(latent_dim, n_embd)
        "quant_b": jnp.zeros((C,), jnp.float32),
        "patch_w": nrm((C, C)),                          # ViT patch embed: 1x1 conv, C->C
        "patch_b": jnp.zeros((C,), jnp.float32),
        "extra_tokens": nrm((cfg["extra_tokens"], C)),   # learnable extra tokens
        "pos_embd": nrm((cfg["extra_tokens"] + cfg["latent_tokens"], C)),
        "lnf_g": jnp.ones((C,), jnp.float32),
        "lnf_b": jnp.zeros((C,), jnp.float32),
        "embd_w": nrm((C, 16 * 16 * 3)),                 # Conv2d(C, 16*16*3, kernel_size=1)
        "embd_b": jnp.zeros((16 * 16 * 3,), jnp.float32),
        "layers": [],
    }
    for _ in range(L):
        p["layers"].append({
            "ln1_g": jnp.ones((C,), jnp.float32), "ln1_b": jnp.zeros((C,), jnp.float32),
            "qkv_w": nrm((C, 3 * C)), "qkv_b": jnp.zeros((3 * C,), jnp.float32),
            "proj_w": nrm((C, C)), "proj_b": jnp.zeros((C,), jnp.float32),
            "ln2_g": jnp.ones((C,), jnp.float32), "ln2_b": jnp.zeros((C,), jnp.float32),
            "fc1_w": nrm((C, 4 * C)), "fc1_b": jnp.zeros((4 * C,), jnp.float32),
            "fc2_w": nrm((4 * C, C)), "fc2_b": jnp.zeros((C,), jnp.float32),
        })
    return p


# ---------------------------------------------------------------------------
# TiTokDecoder forward
# ---------------------------------------------------------------------------

def titok_decoder_forward(params, x, cfg):
    # x: (B, latent_tokens, latent_dim)
    B, T, Ld = x.shape
    C = cfg["n_embd"]
    H = cfg["n_heads"]
    E = cfg["extra_tokens"]

    # quant_proj (Linear Ld->C) and the 1x1 patch-embed conv (C->C) have no
    # nonlinearity between them -> fold into a single (Ld, C) projection.
    w_in = params["quant_w"] @ params["patch_w"]
    b_in = params["quant_b"] @ params["patch_w"] + params["patch_b"]
    tok = linear(x.reshape(B * T, Ld), w_in, b_in,
                 out_dtype=_COMPUTE_DTYPE).reshape(B, T, C)

    # prepend learnable extra tokens, add position embedding
    extra = jnp.broadcast_to(params["extra_tokens"][None].astype(_COMPUTE_DTYPE),
                             (B, E, C))
    seq = jnp.concatenate([extra, tok], axis=1) \
        + params["pos_embd"][None].astype(_COMPUTE_DTYPE)          # (B, S, C)
    S = E + T

    for layer in params["layers"]:
        # --- attention block (pre-LN): LN1+QKV fused, proj+residual fused ---
        qkv = ln_linear(seq.reshape(B * S, C), layer["ln1_g"], layer["ln1_b"],
                        layer["qkv_w"], layer["qkv_b"],
                        out_dtype=_COMPUTE_DTYPE)                   # (B*S, 3C)
        attn_out = attention(qkv.reshape(B, S, 3 * C), H)           # (B, S, C)
        seq = linear(attn_out.reshape(B * S, C), layer["proj_w"], layer["proj_b"],
                     residual=seq.reshape(B * S, C),
                     out_dtype=_COMPUTE_DTYPE).reshape(B, S, C)

        # --- MLP block (pre-LN): LN2 + fc1 + GELU + fc2 + residual, one kernel ---
        seq = fused_mlp(seq.reshape(B * S, C), layer["ln2_g"], layer["ln2_b"],
                        layer["fc1_w"], layer["fc1_b"],
                        layer["fc2_w"], layer["fc2_b"],
                        out_dtype=_COMPUTE_DTYPE).reshape(B, S, C)

    # out_embd = LN_f(vit(x))[:, :(image_sz//16)**2] ; LN is per-token so the
    # slice commutes with it -> only process the surviving hh*hh tokens, and
    # fuse LN_f with the 1x1 embd_proj conv (per-pixel linear).
    hh = cfg["image_sz"] // 16
    out_embd = seq[:, : hh * hh]                                    # (B, hh*hh, C)
    img = ln_linear(out_embd.reshape(B * hh * hh, C),
                    params["lnf_g"], params["lnf_b"],
                    params["embd_w"], params["embd_b"],
                    out_dtype=jnp.float32)                          # (B*hh*hh, 768)

    # rearrange 'b (p1 p2 c) h w -> b c (h p1) (w p2)'
    img = img.reshape(B, hh, hh, 16, 16, 3)                         # (b, h, w, p1, p2, c)
    img = img.transpose(0, 5, 1, 3, 2, 4)                           # (b, c, h, p1, w, p2)
    img = img.reshape(B, 3, hh * 16, hh * 16)
    return img


# ---------------------------------------------------------------------------

if __name__ == "__main__":
    # Small, shape-consistent config (image_sz multiple of 16).
    cfg = dict(
        image_sz=32,        # -> extra_tokens = (32//16)^2 = 4, output (B, 3, 32, 32)
        latent_tokens=8,
        latent_dim=12,
        n_embd=32,
        n_heads=4,
        n_layers=2,
    )
    cfg["extra_tokens"] = (cfg["image_sz"] // 16) ** 2

    key = jax.random.PRNGKey(0)
    pkey, xkey = jax.random.split(key)
    params = init_params(pkey, cfg)

    B = 2
    x = jax.random.normal(xkey, (B, cfg["latent_tokens"], cfg["latent_dim"]),
                          dtype=jnp.float32)

    fwd = jax.jit(lambda p, xx: titok_decoder_forward(p, xx, cfg))
    out = jax.block_until_ready(fwd(params, x))
    assert out.shape == (B, 3, cfg["image_sz"], cfg["image_sz"]), out.shape
    assert out.dtype == jnp.float32
    print("KERNEL_OK")
</pallas_src>

<mosaic_0001>
module attributes {stable_mosaic.version = 11 : i64} {
  func.func @_linear_kernel(%arg0: i32, %arg1: i32, %arg2: i32, %arg3: memref<16x12xbf16, #tpu.memory_space<vmem>>, %arg4: memref<12x32xbf16, #tpu.memory_space<vmem>>, %arg5: memref<1x32xf32, #tpu.memory_space<vmem>>, %arg6: memref<16x32xbf16, #tpu.memory_space<vmem>>, %arg7: memref<16x32xf32, #tpu.memory_space<vmem>>) attributes {dimension_semantics = [#tpu.dimension_semantics<parallel>, #tpu.dimension_semantics<parallel>, #tpu.dimension_semantics<arbitrary>], iteration_bounds = array<i64: 1, 1, 1>, scalar_prefetch = 0 : i64, scratch_operands = 1 : i64, tpu.core_type = #tpu.core_type<tc>, window_params = [{transform_indices = @transform_0, window_bounds = array<i64: 16, 12>}, {transform_indices = @transform_1, window_bounds = array<i64: 12, 32>}, {transform_indices = @transform_2, window_bounds = array<i64: 1, 32>}, {transform_indices = @transform_3, window_bounds = array<i64: 16, 32>}]} {
    %c0_i32 = arith.constant 0 : i32
    %0 = arith.cmpi eq, %arg2, %c0_i32 : i32
    %1 = arith.extui %0 : i1 to i32
    %c0_i32_0 = arith.constant 0 : i32
    %2 = arith.cmpi ne, %1, %c0_i32_0 : i32
    scf.if %2 {
      %cst_10 = arith.constant 0.000000e+00 : f32
      %12 = vector.broadcast %cst_10 : f32 to vector<16x32xf32>
      %c0_11 = arith.constant 0 : index
      %c0_12 = arith.constant 0 : index
      %13 = vector.load %arg7[%c0_11, %c0_12] : memref<16x32xf32, #tpu.memory_space<vmem>>, vector<16x32xf32>
      tpu.vector_store %arg7[%c0_11, %c0_12], %12 {strides = array<i32>} : memref<16x32xf32, #tpu.memory_space<vmem>>, vector<16x32xf32>,
    } else {
    }
    %c0 = arith.constant 0 : index
    %c0_1 = arith.constant 0 : index
    %3 = vector.load %arg7[%c0, %c0_1] : memref<16x32xf32, #tpu.memory_space<vmem>>, vector<16x32xf32>
    %c0_2 = arith.constant 0 : index
    %c0_3 = arith.constant 0 : index
    %4 = vector.load %arg3[%c0_2, %c0_3] : memref<16x12xbf16, #tpu.memory_space<vmem>>, vector<16x12xbf16>
    %c0_4 = arith.constant 0 : index
    %c0_5 = arith.constant 0 : index
    %5 = vector.load %arg4[%c0_4, %c0_5] : memref<12x32xbf16, #tpu.memory_space<vmem>>, vector<12x32xbf16>
    %cst = arith.constant dense<0.000000e+00> : vector<16x32xf32>
    %6 = tpu.matmul %4, %5, %cst {dimension_numbers = #tpu.dot_dimension_numbers<[1], [0], [0], [1], [0, 0, 1, 1], [], []>} : vector<16x12xbf16>, vector<12x32xbf16>, vector<16x32xf32> -> vector<16x32xf32>
    %7 = arith.addf %3, %6 : vector<16x32xf32>
    %c0_6 = arith.constant 0 : index
    %c0_7 = arith.constant 0 : index
    %8 = vector.load %arg7[%c0_6, %c0_7] : memref<16x32xf32, #tpu.memory_space<vmem>>, vector<16x32xf32>
    tpu.vector_store %arg7[%c0_6, %c0_7], %7 {strides = array<i32>} : memref<16x32xf32, #tpu.memory_space<vmem>>, vector<16x32xf32>,
    %c0_i32_8 = arith.constant 0 : i32
    %9 = arith.cmpi eq, %arg2, %c0_i32_8 : i32
    %10 = arith.extui %9 : i1 to i32
    %c0_i32_9 = arith.constant 0 : i32
    %11 = arith.cmpi ne, %10, %c0_i32_9 : i32
    scf.if %11 {
      %c0_10 = arith.constant 0 : index
      %c0_11 = arith.constant 0 : index
      %12 = vector.load %arg7[%c0_10, %c0_11] : memref<16x32xf32, #tpu.memory_space<vmem>>, vector<16x32xf32>
      %c0_12 = arith.constant 0 : index
      %c0_13 = arith.constant 0 : index
      %13 = vector.load %arg5[%c0_12, %c0_13] : memref<1x32xf32, #tpu.memory_space<vmem>>, vector<1x32xf32>
      %14 = vector.broadcast %13 : vector<1x32xf32> to vector<16x32xf32>
      %15 = arith.addf %12, %14 : vector<16x32xf32>
      %16 = arith.truncf %15 : vector<16x32xf32> to vector<16x32xbf16>
      %c0_14 = arith.constant 0 : index
      %c0_15 = arith.constant 0 : index
      %17 = vector.load %arg6[%c0_14, %c0_15] : memref<16x32xbf16, #tpu.memory_space<vmem>>, vector<16x32xbf16>
      tpu.vector_store %arg6[%c0_14, %c0_15], %16 {strides = array<i32>} : memref<16x32xbf16, #tpu.memory_space<vmem>>, vector<16x32xbf16>,
    } else {
    }
    return
  }
  func.func @transform_0(%arg0: i32, %arg1: i32, %arg2: i32) -> (i32, i32) {
    %c0_i32 = arith.constant 0 : i32
    return %arg0, %arg2 : i32, i32
  }
  func.func @transform_1(%arg0: i32, %arg1: i32, %arg2: i32) -> (i32, i32) {
    %c0_i32 = arith.constant 0 : i32
    return %arg2, %arg1 : i32, i32
  }
  func.func @transform_2(%arg0: i32, %arg1: i32, %arg2: i32) -> (i32, i32) {
    %c0_i32 = arith.constant 0 : i32
    %c0_i32_0 = arith.constant 0 : i32
    return %c0_i32, %arg1 : i32, i32
  }
  func.func @transform_3(%arg0: i32, %arg1: i32, %arg2: i32) -> (i32, i32) {
    %c0_i32 = arith.constant 0 : i32
    return %arg0, %arg1 : i32, i32
  }
}

module attributes {stable_mosaic.version = 11 : i64} {
  func.func @_ln_linear_kernel(%arg0: i32, %arg1: i32, %arg2: memref<24x32xbf16, #tpu.memory_space<vmem>>, %arg3: memref<1x32xf32, #tpu.memory_space<vmem>>, %arg4: memref<1x32xf32, #tpu.memory_space<vmem>>, %arg5: memref<32x96xbf16, #tpu.memory_space<vmem>>, %arg6: memref<1x96xf32, #tpu.memory_space<vmem>>, %arg7: memref<24x96xbf16, #tpu.memory_space<vmem>>, %arg8: memref<24x32xbf16, #tpu.memory_space<vmem>>) attributes {dimension_semantics = [#tpu.dimension_semantics<parallel>, #tpu.dimension_semantics<arbitrary>], iteration_bounds = array<i64: 1, 1>, scalar_prefetch = 0 : i64, scratch_operands = 1 : i64, tpu.core_type = #tpu.core_type<tc>, window_params = [{transform_indices = @transform_0, window_bounds = array<i64: 24, 32>}, {pipeline_mode = #tpu.pipeline_mode<synchronous>, transform_indices = @transform_1, window_bounds = array<i64: 1, 32>}, {pipeline_mode = #tpu.pipeline_mode<synchronous>, transform_indices = @transform_2, window_bounds = array<i64: 1, 32>}, {transform_indices = @transform_3, window_bounds = array<i64: 32, 96>}, {transform_indices = @transform_4, window_bounds = array<i64: 1, 96>}, {transform_indices = @transform_5, window_bounds = array<i64: 24, 96>}]} {
    %c0_i32 = arith.constant 0 : i32
    %0 = arith.cmpi eq, %arg1, %c0_i32 : i32
    %1 = arith.extui %0 : i1 to i32
    %c0_i32_0 = arith.constant 0 : i32
    %2 = arith.cmpi ne, %1, %c0_i32_0 : i32
    scf.if %2 {
      %c0_8 = arith.constant 0 : index
      %c0_9 = arith.constant 0 : index
      %11 = vector.load %arg2[%c0_8, %c0_9] : memref<24x32xbf16, #tpu.memory_space<vmem>>, vector<24x32xbf16>
      %12 = arith.extf %11 : vector<24x32xbf16> to vector<24x32xf32>
      %cst_10 = arith.constant dense<0.000000e+00> : vector<24xf32>
      %13 = vector.multi_reduction <add>, %12, %cst_10 [1] : vector<24x32xf32> to vector<24xf32>
      %14 = vector.shape_cast %13 : vector<24xf32> to vector<24x1xf32>
      %cst_11 = arith.constant 3.200000e+01 : f32
      %15 = vector.broadcast %cst_11 : f32 to vector<24x1xf32>
      %16 = arith.divf %14, %15 : vector<24x1xf32>
      %17 = vector.broadcast %16 : vector<24x1xf32> to vector<24x32xf32>
      %18 = arith.subf %12, %17 : vector<24x32xf32>
      %19 = arith.mulf %18, %18 : vector<24x32xf32>
      %cst_12 = arith.constant dense<0.000000e+00> : vector<24xf32>
      %20 = vector.multi_reduction <add>, %19, %cst_12 [1] : vector<24x32xf32> to vector<24xf32>
      %21 = vector.shape_cast %20 : vector<24xf32> to vector<24x1xf32>
      %cst_13 = arith.constant 3.200000e+01 : f32
      %22 = vector.broadcast %cst_13 : f32 to vector<24x1xf32>
      %23 = arith.divf %21, %22 : vector<24x1xf32>
      %cst_14 = arith.constant 9.99999974E-6 : f32
      %24 = vector.broadcast %cst_14 : f32 to vector<24x1xf32>
      %25 = arith.addf %23, %24 : vector<24x1xf32>
      %26 = math.rsqrt %25 : vector<24x1xf32>
      %27 = vector.broadcast %26 : vector<24x1xf32> to vector<24x32xf32>
      %28 = arith.mulf %18, %27 : vector<24x32xf32>
      %c0_15 = arith.constant 0 : index
      %c0_16 = arith.constant 0 : index
      %29 = vector.load %arg3[%c0_15, %c0_16] : memref<1x32xf32, #tpu.memory_space<vmem>>, vector<1x32xf32>
      %30 = vector.broadcast %29 : vector<1x32xf32> to vector<24x32xf32>
      %31 = arith.mulf %28, %30 : vector<24x32xf32>
      %c0_17 = arith.constant 0 : index
      %c0_18 = arith.constant 0 : index
      %32 = vector.load %arg4[%c0_17, %c0_18] : memref<1x32xf32, #tpu.memory_space<vmem>>, vector<1x32xf32>
      %33 = vector.broadcast %32 : vector<1x32xf32> to vector<24x32xf32>
      %34 = arith.addf %31, %33 : vector<24x32xf32>
      %35 = arith.truncf %34 : vector<24x32xf32> to vector<24x32xbf16>
      %c0_19 = arith.constant 0 : index
      %c0_20 = arith.constant 0 : index
      %36 = vector.load %arg8[%c0_19, %c0_20] : memref<24x32xbf16, #tpu.memory_space<vmem>>, vector<24x32xbf16>
      tpu.vector_store %arg8[%c0_19, %c0_20], %35 {strides = array<i32>} : memref<24x32xbf16, #tpu.memory_space<vmem>>, vector<24x32xbf16>,
    } else {
    }
    %c0 = arith.constant 0 : index
    %c0_1 = arith.constant 0 : index
    %3 = vector.load %arg8[%c0, %c0_1] : memref<24x32xbf16, #tpu.memory_space<vmem>>, vector<24x32xbf16>
    %c0_2 = arith.constant 0 : index
    %c0_3 = arith.constant 0 : index
    %4 = vector.load %arg5[%c0_2, %c0_3] : memref<32x96xbf16, #tpu.memory_space<vmem>>, vector<32x96xbf16>
    %cst = arith.constant dense<0.000000e+00> : vector<24x96xf32>
    %5 = tpu.matmul %3, %4, %cst {dimension_numbers = #tpu.dot_dimension_numbers<[1], [0], [0], [1], [0, 0, 1, 1], [], []>} : vector<24x32xbf16>, vector<32x96xbf16>, vector<24x96xf32> -> vector<24x96xf32>
    %c0_4 = arith.constant 0 : index
    %c0_5 = arith.constant 0 : index
    %6 = vector.load %arg6[%c0_4, %c0_5] : memref<1x96xf32, #tpu.memory_space<vmem>>, vector<1x96xf32>
    %7 = vector.broadcast %6 : vector<1x96xf32> to vector<24x96xf32>
    %8 = arith.addf %5, %7 : vector<24x96xf32>
    %9 = arith.truncf %8 : vector<24x96xf32> to vector<24x96xbf16>
    %c0_6 = arith.constant 0 : index
    %c0_7 = arith.constant 0 : index
    %10 = vector.load %arg7[%c0_6, %c0_7] : memref<24x96xbf16, #tpu.memory_space<vmem>>, vector<24x96xbf16>
    tpu.vector_store %arg7[%c0_6, %c0_7], %9 {strides = array<i32>} : memref<24x96xbf16, #tpu.memory_space<vmem>>, vector<24x96xbf16>,
    return
  }
  func.func @transform_0(%arg0: i32, %arg1: i32) -> (i32, i32) {
    %c0_i32 = arith.constant 0 : i32
    %c0_i32_0 = arith.constant 0 : i32
    return %arg0, %c0_i32 : i32, i32
  }
  func.func @transform_1(%arg0: i32, %arg1: i32) -> (i32, i32) {
    %c0_i32 = arith.constant 0 : i32
    %c0_i32_0 = arith.constant 0 : i32
    %c0_i32_1 = arith.constant 0 : i32
    return %c0_i32, %c0_i32_0 : i32, i32
  }
  func.func @transform_2(%arg0: i32, %arg1: i32) -> (i32, i32) {
    %c0_i32 = arith.constant 0 : i32
    %c0_i32_0 = arith.constant 0 : i32
    %c0_i32_1 = arith.constant 0 : i32
    return %c0_i32, %c0_i32_0 : i32, i32
  }
  func.func @transform_3(%arg0: i32, %arg1: i32) -> (i32, i32) {
    %c0_i32 = arith.constant 0 : i32
    %c0_i32_0 = arith.constant 0 : i32
    return %c0_i32, %arg1 : i32, i32
  }
  func.func @transform_4(%arg0: i32, %arg1: i32) -> (i32, i32) {
    %c0_i32 = arith.constant 0 : i32
    %c0_i32_0 = arith.constant 0 : i32
    return %c0_i32, %arg1 : i32, i32
  }
  func.func @transform_5(%arg0: i32, %arg1: i32) -> (i32, i32) {
    %c0_i32 = arith.constant 0 : i32
    return %arg0, %arg1 : i32, i32
  }
}

module attributes {stable_mosaic.version = 11 : i64} {
  func.func @_linear_kernel(%arg0: i32, %arg1: i32, %arg2: i32, %arg3: memref<24x32xbf16, #tpu.memory_space<vmem>>, %arg4: memref<32x32xbf16, #tpu.memory_space<vmem>>, %arg5: memref<1x32xf32, #tpu.memory_space<vmem>>, %arg6: memref<24x32xbf16, #tpu.memory_space<vmem>>, %arg7: memref<24x32xbf16, #tpu.memory_space<vmem>>, %arg8: memref<24x32xf32, #tpu.memory_space<vmem>>) attributes {dimension_semantics = [#tpu.dimension_semantics<parallel>, #tpu.dimension_semantics<parallel>, #tpu.dimension_semantics<arbitrary>], iteration_bounds = array<i64: 1, 1, 1>, scalar_prefetch = 0 : i64, scratch_operands = 1 : i64, tpu.core_type = #tpu.core_type<tc>, window_params = [{transform_indices = @transform_0, window_bounds = array<i64: 24, 32>}, {transform_indices = @transform_1, window_bounds = array<i64: 32, 32>}, {transform_indices = @transform_2, window_bounds = array<i64: 1, 32>}, {transform_indices = @transform_3, window_bounds = array<i64: 24, 32>}, {transform_indices = @transform_4, window_bounds = array<i64: 24, 32>}]} {
    %c0_i32 = arith.constant 0 : i32
    %0 = arith.cmpi eq, %arg2, %c0_i32 : i32
    %1 = arith.extui %0 : i1 to i32
    %c0_i32_0 = arith.constant 0 : i32
    %2 = arith.cmpi ne, %1, %c0_i32_0 : i32
    scf.if %2 {
      %cst_10 = arith.constant 0.000000e+00 : f32
      %12 = vector.broadcast %cst_10 : f32 to vector<24x32xf32>
      %c0_11 = arith.constant 0 : index
      %c0_12 = arith.constant 0 : index
      %13 = vector.load %arg8[%c0_11, %c0_12] : memref<24x32xf32, #tpu.memory_space<vmem>>, vector<24x32xf32>
      tpu.vector_store %arg8[%c0_11, %c0_12], %12 {strides = array<i32>} : memref<24x32xf32, #tpu.memory_space<vmem>>, vector<24x32xf32>,
    } else {
    }
    %c0 = arith.constant 0 : index
    %c0_1 = arith.constant 0 : index
    %3 = vector.load %arg8[%c0, %c0_1] : memref<24x32xf32, #tpu.memory_space<vmem>>, vector<24x32xf32>
    %c0_2 = arith.constant 0 : index
    %c0_3 = arith.constant 0 : index
    %4 = vector.load %arg3[%c0_2, %c0_3] : memref<24x32xbf16, #tpu.memory_space<vmem>>, vector<24x32xbf16>
    %c0_4 = arith.constant 0 : index
    %c0_5 = arith.constant 0 : index
    %5 = vector.load %arg4[%c0_4, %c0_5] : memref<32x32xbf16, #tpu.memory_space<vmem>>, vector<32x32xbf16>
    %cst = arith.constant dense<0.000000e+00> : vector<24x32xf32>
    %6 = tpu.matmul %4, %5, %cst {dimension_numbers = #tpu.dot_dimension_numbers<[1], [0], [0], [1], [0, 0, 1, 1], [], []>} : vector<24x32xbf16>, vector<32x32xbf16>, vector<24x32xf32> -> vector<24x32xf32>
    %7 = arith.addf %3, %6 : vector<24x32xf32>
    %c0_6 = arith.constant 0 : index
    %c0_7 = arith.constant 0 : index
    %8 = vector.load %arg8[%c0_6, %c0_7] : memref<24x32xf32, #tpu.memory_space<vmem>>, vector<24x32xf32>
    tpu.vector_store %arg8[%c0_6, %c0_7], %7 {strides = array<i32>} : memref<24x32xf32, #tpu.memory_space<vmem>>, vector<24x32xf32>,
    %c0_i32_8 = arith.constant 0 : i32
    %9 = arith.cmpi eq, %arg2, %c0_i32_8 : i32
    %10 = arith.extui %9 : i1 to i32
    %c0_i32_9 = arith.constant 0 : i32
    %11 = arith.cmpi ne, %10, %c0_i32_9 : i32
    scf.if %11 {
      %c0_10 = arith.constant 0 : index
      %c0_11 = arith.constant 0 : index
      %12 = vector.load %arg8[%c0_10, %c0_11] : memref<24x32xf32, #tpu.memory_space<vmem>>, vector<24x32xf32>
      %c0_12 = arith.constant 0 : index
      %c0_13 = arith.constant 0 : index
      %13 = vector.load %arg5[%c0_12, %c0_13] : memref<1x32xf32, #tpu.memory_space<vmem>>, vector<1x32xf32>
      %14 = vector.broadcast %13 : vector<1x32xf32> to vector<24x32xf32>
      %15 = arith.addf %12, %14 : vector<24x32xf32>
      %c0_14 = arith.constant 0 : index
      %c0_15 = arith.constant 0 : index
      %16 = vector.load %arg6[%c0_14, %c0_15] : memref<24x32xbf16, #tpu.memory_space<vmem>>, vector<24x32xbf16>
      %17 = arith.extf %16 : vector<24x32xbf16> to vector<24x32xf32>
      %18 = arith.addf %15, %17 : vector<24x32xf32>
      %19 = arith.truncf %18 : vector<24x32xf32> to vector<24x32xbf16>
      %c0_16 = arith.constant 0 : index
      %c0_17 = arith.constant 0 : index
      %20 = vector.load %arg7[%c0_16, %c0_17] : memref<24x32xbf16, #tpu.memory_space<vmem>>, vector<24x32xbf16>
      tpu.vector_store %arg7[%c0_16, %c0_17], %19 {strides = array<i32>} : memref<24x32xbf16, #tpu.memory_space<vmem>>, vector<24x32xbf16>,
    } else {
    }
    return
  }
  func.func @transform_0(%arg0: i32, %arg1: i32, %arg2: i32) -> (i32, i32) {
    %c0_i32 = arith.constant 0 : i32
    return %arg0, %arg2 : i32, i32
  }
  func.func @transform_1(%arg0: i32, %arg1: i32, %arg2: i32) -> (i32, i32) {
    %c0_i32 = arith.constant 0 : i32
    return %arg2, %arg1 : i32, i32
  }
  func.func @transform_2(%arg0: i32, %arg1: i32, %arg2: i32) -> (i32, i32) {
    %c0_i32 = arith.constant 0 : i32
    %c0_i32_0 = arith.constant 0 : i32
    return %c0_i32, %arg1 : i32, i32
  }
  func.func @transform_3(%arg0: i32, %arg1: i32, %arg2: i32) -> (i32, i32) {
    %c0_i32 = arith.constant 0 : i32
    return %arg0, %arg1 : i32, i32
  }
  func.func @transform_4(%arg0: i32, %arg1: i32, %arg2: i32) -> (i32, i32) {
    %c0_i32 = arith.constant 0 : i32
    return %arg0, %arg1 : i32, i32
  }
}

module attributes {stable_mosaic.version = 11 : i64} {
  func.func @_attn_kernel(%arg0: i32, %arg1: memref<1x12x96xbf16, #tpu.memory_space<vmem>>, %arg2: memref<1x12x32xbf16, #tpu.memory_space<vmem>>) attributes {dimension_semantics = [#tpu.dimension_semantics<parallel>], iteration_bounds = array<i64: 2>, scalar_prefetch = 0 : i64, scratch_operands = 0 : i64, tpu.core_type = #tpu.core_type<tc>, window_params = [{transform_indices = @transform_0, window_bounds = array<i64: 1, 12, 96>}, {transform_indices = @transform_1, window_bounds = array<i64: 1, 12, 32>}]} {
    %c0 = arith.constant 0 : index
    %c0_0 = arith.constant 0 : index
    %c0_1 = arith.constant 0 : index
    %0 = vector.load %arg1[%c0, %c0_0, %c0_1] : memref<1x12x96xbf16, #tpu.memory_space<vmem>>, vector<1x12x96xbf16>
    %1 = vector.shape_cast %0 : vector<1x12x96xbf16> to vector<12x96xbf16>
    %2 = vector.extract_strided_slice %1 {offsets = [0, 0], sizes = [12, 32], strides = [1, 1]} : vector<12x96xbf16> to vector<12x32xbf16>
    %cst = arith.constant 3.535160e-01 : bf16
    %3 = vector.broadcast %cst : bf16 to vector<12x32xbf16>
    %4 = arith.mulf %2, %3 : vector<12x32xbf16>
    %5 = vector.extract_strided_slice %1 {offsets = [0, 32], sizes = [12, 32], strides = [1, 1]} : vector<12x96xbf16> to vector<12x32xbf16>
    %6 = vector.extract_strided_slice %1 {offsets = [0, 64], sizes = [12, 32], strides = [1, 1]} : vector<12x96xbf16> to vector<12x32xbf16>
    %7 = vector.extract_strided_slice %4 {offsets = [0, 0], sizes = [12, 8], strides = [1, 1]} : vector<12x32xbf16> to vector<12x8xbf16>
    %8 = vector.extract_strided_slice %5 {offsets = [0, 0], sizes = [12, 8], strides = [1, 1]} : vector<12x32xbf16> to vector<12x8xbf16>
    %9 = vector.extract_strided_slice %6 {offsets = [0, 0], sizes = [12, 8], strides = [1, 1]} : vector<12x32xbf16> to vector<12x8xbf16>
    %cst_2 = arith.constant dense<0.000000e+00> : vector<12x12xf32>
    %10 = tpu.matmul %7, %8, %cst_2 {dimension_numbers = #tpu.dot_dimension_numbers<[1], [1], [0], [0], [0, 0, 1, 0], [], []>} : vector<12x8xbf16>, vector<12x8xbf16>, vector<12x12xf32> -> vector<12x12xf32>
    %cst_3 = arith.constant dense<0xFF800000> : vector<12xf32>
    %11 = vector.multi_reduction <maximumf>, %10, %cst_3 [1] : vector<12x12xf32> to vector<12xf32>
    %12 = vector.shape_cast %11 : vector<12xf32> to vector<12x1xf32>
    %13 = vector.broadcast %12 : vector<12x1xf32> to vector<12x12xf32>
    %14 = arith.subf %10, %13 : vector<12x12xf32>
    %15 = math.exp %14 : vector<12x12xf32>
    %cst_4 = arith.constant dense<0.000000e+00> : vector<12xf32>
    %16 = vector.multi_reduction <add>, %15, %cst_4 [1] : vector<12x12xf32> to vector<12xf32>
    %17 = vector.shape_cast %16 : vector<12xf32> to vector<12x1xf32>
    %18 = tpu.reciprocal %17 {approx = true} : vector<12x1xf32> -> vector<12x1xf32>
    %19 = vector.broadcast %18 : vector<12x1xf32> to vector<12x12xf32>
    %20 = arith.mulf %15, %19 : vector<12x12xf32>
    %21 = arith.truncf %20 : vector<12x12xf32> to vector<12x12xbf16>
    %cst_5 = arith.constant dense<0.000000e+00> : vector<12x8xf32>
    %22 = tpu.matmul %21, %9, %cst_5 {dimension_numbers = #tpu.dot_dimension_numbers<[1], [0], [0], [1], [0, 0, 1, 1], [], []>} : vector<12x12xbf16>, vector<12x8xbf16>, vector<12x8xf32> -> vector<12x8xf32>
    %23 = vector.extract_strided_slice %4 {offsets = [0, 8], sizes = [12, 8], strides = [1, 1]} : vector<12x32xbf16> to vector<12x8xbf16>
    %24 = vector.extract_strided_slice %5 {offsets = [0, 8], sizes = [12, 8], strides = [1, 1]} : vector<12x32xbf16> to vector<12x8xbf16>
    %25 = vector.extract_strided_slice %6 {offsets = [0, 8], sizes = [12, 8], strides = [1, 1]} : vector<12x32xbf16> to vector<12x8xbf16>
    %cst_6 = arith.constant dense<0.000000e+00> : vector<12x12xf32>
    %26 = tpu.matmul %23, %24, %cst_6 {dimension_numbers = #tpu.dot_dimension_numbers<[1], [1], [0], [0], [0, 0, 1, 0], [], []>} : vector<12x8xbf16>, vector<12x8xbf16>, vector<12x12xf32> -> vector<12x12xf32>
    %cst_7 = arith.constant dense<0xFF800000> : vector<12xf32>
    %27 = vector.multi_reduction <maximumf>, %26, %cst_7 [1] : vector<12x12xf32> to vector<12xf32>
    %28 = vector.shape_cast %27 : vector<12xf32> to vector<12x1xf32>
    %29 = vector.broadcast %28 : vector<12x1xf32> to vector<12x12xf32>
    %30 = arith.subf %26, %29 : vector<12x12xf32>
    %31 = math.exp %30 : vector<12x12xf32>
    %cst_8 = arith.constant dense<0.000000e+00> : vector<12xf32>
    %32 = vector.multi_reduction <add>, %31, %cst_8 [1] : vector<12x12xf32> to vector<12xf32>
    %33 = vector.shape_cast %32 : vector<12xf32> to vector<12x1xf32>
    %34 = tpu.reciprocal %33 {approx = true} : vector<12x1xf32> -> vector<12x1xf32>
    %35 = vector.broadcast %34 : vector<12x1xf32> to vector<12x12xf32>
    %36 = arith.mulf %31, %35 : vector<12x12xf32>
    %37 = arith.truncf %36 : vector<12x12xf32> to vector<12x12xbf16>
    %cst_9 = arith.constant dense<0.000000e+00> : vector<12x8xf32>
    %38 = tpu.matmul %37, %25, %cst_9 {dimension_numbers = #tpu.dot_dimension_numbers<[1], [0], [0], [1], [0, 0, 1, 1], [], []>} : vector<12x12xbf16>, vector<12x8xbf16>, vector<12x8xf32> -> vector<12x8xf32>
    %39 = vector.extract_strided_slice %4 {offsets = [0, 16], sizes = [12, 8], strides = [1, 1]} : vector<12x32xbf16> to vector<12x8xbf16>
    %40 = vector.extract_strided_slice %5 {offsets = [0, 16], sizes = [12, 8], strides = [1, 1]} : vector<12x32xbf16> to vector<12x8xbf16>
    %41 = vector.extract_strided_slice %6 {offsets = [0, 16], sizes = [12, 8], strides = [1, 1]} : vector<12x32xbf16> to vector<12x8xbf16>
    %cst_10 = arith.constant dense<0.000000e+00> : vector<12x12xf32>
    %42 = tpu.matmul %39, %40, %cst_10 {dimension_numbers = #tpu.dot_dimension_numbers<[1], [1], [0], [0], [0, 0, 1, 0], [], []>} : vector<12x8xbf16>, vector<12x8xbf16>, vector<12x12xf32> -> vector<12x12xf32>
    %cst_11 = arith.constant dense<0xFF800000> : vector<12xf32>
    %43 = vector.multi_reduction <maximumf>, %42, %cst_11 [1] : vector<12x12xf32> to vector<12xf32>
    %44 = vector.shape_cast %43 : vector<12xf32> to vector<12x1xf32>
    %45 = vector.broadcast %44 : vector<12x1xf32> to vector<12x12xf32>
    %46 = arith.subf %42, %45 : vector<12x12xf32>
    %47 = math.exp %46 : vector<12x12xf32>
    %cst_12 = arith.constant dense<0.000000e+00> : vector<12xf32>
    %48 = vector.multi_reduction <add>, %47, %cst_12 [1] : vector<12x12xf32> to vector<12xf32>
    %49 = vector.shape_cast %48 : vector<12xf32> to vector<12x1xf32>
    %50 = tpu.reciprocal %49 {approx = true} : vector<12x1xf32> -> vector<12x1xf32>
    %51 = vector.broadcast %50 : vector<12x1xf32> to vector<12x12xf32>
    %52 = arith.mulf %47, %51 : vector<12x12xf32>
    %53 = arith.truncf %52 : vector<12x12xf32> to vector<12x12xbf16>
    %cst_13 = arith.constant dense<0.000000e+00> : vector<12x8xf32>
    %54 = tpu.matmul %53, %41, %cst_13 {dimension_numbers = #tpu.dot_dimension_numbers<[1], [0], [0], [1], [0, 0, 1, 1], [], []>} : vector<12x12xbf16>, vector<12x8xbf16>, vector<12x8xf32> -> vector<12x8xf32>
    %55 = vector.extract_strided_slice %4 {offsets = [0, 24], sizes = [12, 8], strides = [1, 1]} : vector<12x32xbf16> to vector<12x8xbf16>
    %56 = vector.extract_strided_slice %5 {offsets = [0, 24], sizes = [12, 8], strides = [1, 1]} : vector<12x32xbf16> to vector<12x8xbf16>
    %57 = vector.extract_strided_slice %6 {offsets = [0, 24], sizes = [12, 8], strides = [1, 1]} : vector<12x32xbf16> to vector<12x8xbf16>
    %cst_14 = arith.constant dense<0.000000e+00> : vector<12x12xf32>
    %58 = tpu.matmul %55, %56, %cst_14 {dimension_numbers = #tpu.dot_dimension_numbers<[1], [1], [0], [0], [0, 0, 1, 0], [], []>} : vector<12x8xbf16>, vector<12x8xbf16>, vector<12x12xf32> -> vector<12x12xf32>
    %cst_15 = arith.constant dense<0xFF800000> : vector<12xf32>
    %59 = vector.multi_reduction <maximumf>, %58, %cst_15 [1] : vector<12x12xf32> to vector<12xf32>
    %60 = vector.shape_cast %59 : vector<12xf32> to vector<12x1xf32>
    %61 = vector.broadcast %60 : vector<12x1xf32> to vector<12x12xf32>
    %62 = arith.subf %58, %61 : vector<12x12xf32>
    %63 = math.exp %62 : vector<12x12xf32>
    %cst_16 = arith.constant dense<0.000000e+00> : vector<12xf32>
    %64 = vector.multi_reduction <add>, %63, %cst_16 [1] : vector<12x12xf32> to vector<12xf32>
    %65 = vector.shape_cast %64 : vector<12xf32> to vector<12x1xf32>
    %66 = tpu.reciprocal %65 {approx = true} : vector<12x1xf32> -> vector<12x1xf32>
    %67 = vector.broadcast %66 : vector<12x1xf32> to vector<12x12xf32>
    %68 = arith.mulf %63, %67 : vector<12x12xf32>
    %69 = arith.truncf %68 : vector<12x12xf32> to vector<12x12xbf16>
    %cst_17 = arith.constant dense<0.000000e+00> : vector<12x8xf32>
    %70 = tpu.matmul %69, %57, %cst_17 {dimension_numbers = #tpu.dot_dimension_numbers<[1], [0], [0], [1], [0, 0, 1, 1], [], []>} : vector<12x12xbf16>, vector<12x8xbf16>, vector<12x8xf32> -> vector<12x8xf32>
    %71 = tpu.concatenate %22, %38, %54, %70 in 1 : vector<12x8xf32>, vector<12x8xf32>, vector<12x8xf32>, vector<12x8xf32> -> vector<12x32xf32>
    %72 = arith.truncf %71 : vector<12x32xf32> to vector<12x32xbf16>
    %c0_18 = arith.constant 0 : index
    %c0_19 = arith.constant 0 : index
    %c0_20 = arith.constant 0 : index
    %73 = vector.load %arg2[%c0_18, %c0_19, %c0_20] : memref<1x12x32xbf16, #tpu.memory_space<vmem>>, vector<1x12x32xbf16>
    %74 = vector.shape_cast %73 : vector<1x12x32xbf16> to vector<12x32xbf16>
    %75 = vector.shape_cast %72 : vector<12x32xbf16> to vector<1x12x32xbf16>
    tpu.vector_store %arg2[%c0_18, %c0_19, %c0_20], %75 {strides = array<i32>} : memref<1x12x32xbf16, #tpu.memory_space<vmem>>, vector<1x12x32xbf16>,
    return
  }
  func.func @transform_0(%arg0: i32) -> (i32, i32, i32) {
    %c0_i32 = arith.constant 0 : i32
    %c0_i32_0 = arith.constant 0 : i32
    %c0_i32_1 = arith.constant 0 : i32
    return %arg0, %c0_i32, %c0_i32_0 : i32, i32, i32
  }
  func.func @transform_1(%arg0: i32) -> (i32, i32, i32) {
    %c0_i32 = arith.constant 0 : i32
    %c0_i32_0 = arith.constant 0 : i32
    %c0_i32_1 = arith.constant 0 : i32
    return %arg0, %c0_i32, %c0_i32_0 : i32, i32, i32
  }
}

module attributes {stable_mosaic.version = 11 : i64} {
  func.func @_mlp_kernel(%arg0: i32, %arg1: i32, %arg2: memref<24x32xbf16, #tpu.memory_space<vmem>>, %arg3: memref<1x32xf32, #tpu.memory_space<vmem>>, %arg4: memref<1x32xf32, #tpu.memory_space<vmem>>, %arg5: memref<32x128xbf16, #tpu.memory_space<vmem>>, %arg6: memref<1x128xf32, #tpu.memory_space<vmem>>, %arg7: memref<128x32xbf16, #tpu.memory_space<vmem>>, %arg8: memref<1x32xf32, #tpu.memory_space<vmem>>, %arg9: memref<24x32xbf16, #tpu.memory_space<vmem>>, %arg10: memref<24x32xbf16, #tpu.memory_space<vmem>>, %arg11: memref<24x32xf32, #tpu.memory_space<vmem>>) attributes {dimension_semantics = [#tpu.dimension_semantics<parallel>, #tpu.dimension_semantics<arbitrary>], iteration_bounds = array<i64: 1, 1>, scalar_prefetch = 0 : i64, scratch_operands = 2 : i64, tpu.core_type = #tpu.core_type<tc>, window_params = [{transform_indices = @transform_0, window_bounds = array<i64: 24, 32>}, {pipeline_mode = #tpu.pipeline_mode<synchronous>, transform_indices = @transform_1, window_bounds = array<i64: 1, 32>}, {pipeline_mode = #tpu.pipeline_mode<synchronous>, transform_indices = @transform_2, window_bounds = array<i64: 1, 32>}, {transform_indices = @transform_3, window_bounds = array<i64: 32, 128>}, {transform_indices = @transform_4, window_bounds = array<i64: 1, 128>}, {transform_indices = @transform_5, window_bounds = array<i64: 128, 32>}, {pipeline_mode = #tpu.pipeline_mode<synchronous>, transform_indices = @transform_6, window_bounds = array<i64: 1, 32>}, {transform_indices = @transform_7, window_bounds = array<i64: 24, 32>}]} {
    %c0_i32 = arith.constant 0 : i32
    %0 = arith.cmpi eq, %arg1, %c0_i32 : i32
    %1 = arith.extui %0 : i1 to i32
    %c0_i32_0 = arith.constant 0 : i32
    %2 = arith.cmpi ne, %1, %c0_i32_0 : i32
    scf.if %2 {
      %c0_19 = arith.constant 0 : index
      %c0_20 = arith.constant 0 : index
      %31 = vector.load %arg2[%c0_19, %c0_20] : memref<24x32xbf16, #tpu.memory_space<vmem>>, vector<24x32xbf16>
      %32 = arith.extf %31 : vector<24x32xbf16> to vector<24x32xf32>
      %cst_21 = arith.constant dense<0.000000e+00> : vector<24xf32>
      %33 = vector.multi_reduction <add>, %32, %cst_21 [1] : vector<24x32xf32> to vector<24xf32>
      %34 = vector.shape_cast %33 : vector<24xf32> to vector<24x1xf32>
      %cst_22 = arith.constant 3.200000e+01 : f32
      %35 = vector.broadcast %cst_22 : f32 to vector<24x1xf32>
      %36 = arith.divf %34, %35 : vector<24x1xf32>
      %37 = vector.broadcast %36 : vector<24x1xf32> to vector<24x32xf32>
      %38 = arith.subf %32, %37 : vector<24x32xf32>
      %39 = arith.mulf %38, %38 : vector<24x32xf32>
      %cst_23 = arith.constant dense<0.000000e+00> : vector<24xf32>
      %40 = vector.multi_reduction <add>, %39, %cst_23 [1] : vector<24x32xf32> to vector<24xf32>
      %41 = vector.shape_cast %40 : vector<24xf32> to vector<24x1xf32>
      %cst_24 = arith.constant 3.200000e+01 : f32
      %42 = vector.broadcast %cst_24 : f32 to vector<24x1xf32>
      %43 = arith.divf %41, %42 : vector<24x1xf32>
      %cst_25 = arith.constant 9.99999974E-6 : f32
      %44 = vector.broadcast %cst_25 : f32 to vector<24x1xf32>
      %45 = arith.addf %43, %44 : vector<24x1xf32>
      %46 = math.rsqrt %45 : vector<24x1xf32>
      %47 = vector.broadcast %46 : vector<24x1xf32> to vector<24x32xf32>
      %48 = arith.mulf %38, %47 : vector<24x32xf32>
      %c0_26 = arith.constant 0 : index
      %c0_27 = arith.constant 0 : index
      %49 = vector.load %arg3[%c0_26, %c0_27] : memref<1x32xf32, #tpu.memory_space<vmem>>, vector<1x32xf32>
      %50 = vector.broadcast %49 : vector<1x32xf32> to vector<24x32xf32>
      %51 = arith.mulf %48, %50 : vector<24x32xf32>
      %c0_28 = arith.constant 0 : index
      %c0_29 = arith.constant 0 : index
      %52 = vector.load %arg4[%c0_28, %c0_29] : memref<1x32xf32, #tpu.memory_space<vmem>>, vector<1x32xf32>
      %53 = vector.broadcast %52 : vector<1x32xf32> to vector<24x32xf32>
      %54 = arith.addf %51, %53 : vector<24x32xf32>
      %55 = arith.truncf %54 : vector<24x32xf32> to vector<24x32xbf16>
      %c0_30 = arith.constant 0 : index
      %c0_31 = arith.constant 0 : index
      %56 = vector.load %arg10[%c0_30, %c0_31] : memref<24x32xbf16, #tpu.memory_space<vmem>>, vector<24x32xbf16>
      tpu.vector_store %arg10[%c0_30, %c0_31], %55 {strides = array<i32>} : memref<24x32xbf16, #tpu.memory_space<vmem>>, vector<24x32xbf16>,
      %cst_32 = arith.constant 0.000000e+00 : f32
      %57 = vector.broadcast %cst_32 : f32 to vector<24x32xf32>
      %c0_33 = arith.constant 0 : index
      %c0_34 = arith.constant 0 : index
      %58 = vector.load %arg11[%c0_33, %c0_34] : memref<24x32xf32, #tpu.memory_space<vmem>>, vector<24x32xf32>
      tpu.vector_store %arg11[%c0_33, %c0_34], %57 {strides = array<i32>} : memref<24x32xf32, #tpu.memory_space<vmem>>, vector<24x32xf32>,
    } else {
    }
    %c0 = arith.constant 0 : index
    %c0_1 = arith.constant 0 : index
    %3 = vector.load %arg10[%c0, %c0_1] : memref<24x32xbf16, #tpu.memory_space<vmem>>, vector<24x32xbf16>
    %c0_2 = arith.constant 0 : index
    %c0_3 = arith.constant 0 : index
    %4 = vector.load %arg5[%c0_2, %c0_3] : memref<32x128xbf16, #tpu.memory_space<vmem>>, vector<32x128xbf16>
    %cst = arith.constant dense<0.000000e+00> : vector<24x128xf32>
    %5 = tpu.matmul %3, %4, %cst {dimension_numbers = #tpu.dot_dimension_numbers<[1], [0], [0], [1], [0, 0, 1, 1], [], []>} : vector<24x32xbf16>, vector<32x128xbf16>, vector<24x128xf32> -> vector<24x128xf32>
    %c0_4 = arith.constant 0 : index
    %c0_5 = arith.constant 0 : index
    %6 = vector.load %arg6[%c0_4, %c0_5] : memref<1x128xf32, #tpu.memory_space<vmem>>, vector<1x128xf32>
    %7 = vector.broadcast %6 : vector<1x128xf32> to vector<24x128xf32>
    %8 = arith.addf %5, %7 : vector<24x128xf32>
    %cst_6 = arith.constant 5.000000e-01 : f32
    %9 = vector.broadcast %cst_6 : f32 to vector<24x128xf32>
    %10 = arith.mulf %9, %8 : vector<24x128xf32>
    %cst_7 = arith.constant 4.471500e-02 : f32
    %11 = vector.broadcast %cst_7 : f32 to vector<24x128xf32>
    %12 = arith.mulf %11, %8 : vector<24x128xf32>
    %13 = arith.mulf %12, %8 : vector<24x128xf32>
    %14 = arith.mulf %13, %8 : vector<24x128xf32>
    %15 = arith.addf %8, %14 : vector<24x128xf32>
    %cst_8 = arith.constant 0.797884583 : f32
    %16 = vector.broadcast %cst_8 : f32 to vector<24x128xf32>
    %17 = arith.mulf %16, %15 : vector<24x128xf32>
    %18 = math.tanh %17 : vector<24x128xf32>
    %cst_9 = arith.constant 1.000000e+00 : f32
    %19 = vector.broadcast %cst_9 : f32 to vector<24x128xf32>
    %20 = arith.addf %19, %18 : vector<24x128xf32>
    %21 = arith.mulf %10, %20 : vector<24x128xf32>
    %c0_10 = arith.constant 0 : index
    %c0_11 = arith.constant 0 : index
    %22 = vector.load %arg11[%c0_10, %c0_11] : memref<24x32xf32, #tpu.memory_space<vmem>>, vector<24x32xf32>
    %23 = arith.truncf %21 : vector<24x128xf32> to vector<24x128xbf16>
    %c0_12 = arith.constant 0 : index
    %c0_13 = arith.constant 0 : index
    %24 = vector.load %arg7[%c0_12, %c0_13] : memref<128x32xbf16, #tpu.memory_space<vmem>>, vector<128x32xbf16>
    %cst_14 = arith.constant dense<0.000000e+00> : vector<24x32xf32>
    %25 = tpu.matmul %23, %24, %cst_14 {dimension_numbers = #tpu.dot_dimension_numbers<[1], [0], [0], [1], [0, 0, 1, 1], [], []>} : vector<24x128xbf16>, vector<128x32xbf16>, vector<24x32xf32> -> vector<24x32xf32>
    %26 = arith.addf %22, %25 : vector<24x32xf32>
    %c0_15 = arith.constant 0 : index
    %c0_16 = arith.constant 0 : index
    %27 = vector.load %arg11[%c0_15, %c0_16] : memref<24x32xf32, #tpu.memory_space<vmem>>, vector<24x32xf32>
    tpu.vector_store %arg11[%c0_15, %c0_16], %26 {strides = array<i32>} : memref<24x32xf32, #tpu.memory_space<vmem>>, vector<24x32xf32>,
    %c0_i32_17 = arith.constant 0 : i32
    %28 = arith.cmpi eq, %arg1, %c0_i32_17 : i32
    %29 = arith.extui %28 : i1 to i32
    %c0_i32_18 = arith.constant 0 : i32
    %30 = arith.cmpi ne, %29, %c0_i32_18 : i32
    scf.if %30 {
      %c0_19 = arith.constant 0 : index
      %c0_20 = arith.constant 0 : index
      %31 = vector.load %arg11[%c0_19, %c0_20] : memref<24x32xf32, #tpu.memory_space<vmem>>, vector<24x32xf32>
      %c0_21 = arith.constant 0 : index
      %c0_22 = arith.constant 0 : index
      %32 = vector.load %arg8[%c0_21, %c0_22] : memref<1x32xf32, #tpu.memory_space<vmem>>, vector<1x32xf32>
      %33 = vector.broadcast %32 : vector<1x32xf32> to vector<24x32xf32>
      %34 = arith.addf %31, %33 : vector<24x32xf32>
      %c0_23 = arith.constant 0 : index
      %c0_24 = arith.constant 0 : index
      %35 = vector.load %arg2[%c0_23, %c0_24] : memref<24x32xbf16, #tpu.memory_space<vmem>>, vector<24x32xbf16>
      %36 = arith.extf %35 : vector<24x32xbf16> to vector<24x32xf32>
      %37 = arith.addf %34, %36 : vector<24x32xf32>
      %38 = arith.truncf %37 : vector<24x32xf32> to vector<24x32xbf16>
      %c0_25 = arith.constant 0 : index
      %c0_26 = arith.constant 0 : index
      %39 = vector.load %arg9[%c0_25, %c0_26] : memref<24x32xbf16, #tpu.memory_space<vmem>>, vector<24x32xbf16>
      tpu.vector_store %arg9[%c0_25, %c0_26], %38 {strides = array<i32>} : memref<24x32xbf16, #tpu.memory_space<vmem>>, vector<24x32xbf16>,
    } else {
    }
    return
  }
  func.func @transform_0(%arg0: i32, %arg1: i32) -> (i32, i32) {
    %c0_i32 = arith.constant 0 : i32
    %c0_i32_0 = arith.constant 0 : i32
    return %arg0, %c0_i32 : i32, i32
  }
  func.func @transform_1(%arg0: i32, %arg1: i32) -> (i32, i32) {
    %c0_i32 = arith.constant 0 : i32
    %c0_i32_0 = arith.constant 0 : i32
    %c0_i32_1 = arith.constant 0 : i32
    return %c0_i32, %c0_i32_0 : i32, i32
  }
  func.func @transform_2(%arg0: i32, %arg1: i32) -> (i32, i32) {
    %c0_i32 = arith.constant 0 : i32
    %c0_i32_0 = arith.constant 0 : i32
    %c0_i32_1 = arith.constant 0 : i32
    return %c0_i32, %c0_i32_0 : i32, i32
  }
  func.func @transform_3(%arg0: i32, %arg1: i32) -> (i32, i32) {
    %c0_i32 = arith.constant 0 : i32
    %c0_i32_0 = arith.constant 0 : i32
    return %c0_i32, %arg1 : i32, i32
  }
  func.func @transform_4(%arg0: i32, %arg1: i32) -> (i32, i32) {
    %c0_i32 = arith.constant 0 : i32
    %c0_i32_0 = arith.constant 0 : i32
    return %c0_i32, %arg1 : i32, i32
  }
  func.func @transform_5(%arg0: i32, %arg1: i32) -> (i32, i32) {
    %c0_i32 = arith.constant 0 : i32
    %c0_i32_0 = arith.constant 0 : i32
    return %arg1, %c0_i32 : i32, i32
  }
  func.func @transform_6(%arg0: i32, %arg1: i32) -> (i32, i32) {
    %c0_i32 = arith.constant 0 : i32
    %c0_i32_0 = arith.constant 0 : i32
    %c0_i32_1 = arith.constant 0 : i32
    return %c0_i32, %c0_i32_0 : i32, i32
  }
  func.func @transform_7(%arg0: i32, %arg1: i32) -> (i32, i32) {
    %c0_i32 = arith.constant 0 : i32
    %c0_i32_0 = arith.constant 0 : i32
    return %arg0, %c0_i32 : i32, i32
  }
}

module attributes {stable_mosaic.version = 11 : i64} {
  func.func @_ln_linear_kernel(%arg0: i32, %arg1: i32, %arg2: memref<8x32xbf16, #tpu.memory_space<vmem>>, %arg3: memref<1x32xf32, #tpu.memory_space<vmem>>, %arg4: memref<1x32xf32, #tpu.memory_space<vmem>>, %arg5: memref<32x384xbf16, #tpu.memory_space<vmem>>, %arg6: memref<1x384xf32, #tpu.memory_space<vmem>>, %arg7: memref<8x384xf32, #tpu.memory_space<vmem>>, %arg8: memref<8x32xbf16, #tpu.memory_space<vmem>>) attributes {dimension_semantics = [#tpu.dimension_semantics<parallel>, #tpu.dimension_semantics<arbitrary>], iteration_bounds = array<i64: 1, 2>, scalar_prefetch = 0 : i64, scratch_operands = 1 : i64, tpu.core_type = #tpu.core_type<tc>, window_params = [{transform_indices = @transform_0, window_bounds = array<i64: 8, 32>}, {pipeline_mode = #tpu.pipeline_mode<synchronous>, transform_indices = @transform_1, window_bounds = array<i64: 1, 32>}, {pipeline_mode = #tpu.pipeline_mode<synchronous>, transform_indices = @transform_2, window_bounds = array<i64: 1, 32>}, {transform_indices = @transform_3, window_bounds = array<i64: 32, 384>}, {transform_indices = @transform_4, window_bounds = array<i64: 1, 384>}, {transform_indices = @transform_5, window_bounds = array<i64: 8, 384>}]} {
    %c0_i32 = arith.constant 0 : i32
    %0 = arith.cmpi eq, %arg1, %c0_i32 : i32
    %1 = arith.extui %0 : i1 to i32
    %c0_i32_0 = arith.constant 0 : i32
    %2 = arith.cmpi ne, %1, %c0_i32_0 : i32
    scf.if %2 {
      %c0_8 = arith.constant 0 : index
      %c0_9 = arith.constant 0 : index
      %10 = vector.load %arg2[%c0_8, %c0_9] : memref<8x32xbf16, #tpu.memory_space<vmem>>, vector<8x32xbf16>
      %11 = arith.extf %10 : vector<8x32xbf16> to vector<8x32xf32>
      %cst_10 = arith.constant dense<0.000000e+00> : vector<8xf32>
      %12 = vector.multi_reduction <add>, %11, %cst_10 [1] : vector<8x32xf32> to vector<8xf32>
      %13 = vector.shape_cast %12 : vector<8xf32> to vector<8x1xf32>
      %cst_11 = arith.constant 3.200000e+01 : f32
      %14 = vector.broadcast %cst_11 : f32 to vector<8x1xf32>
      %15 = arith.divf %13, %14 : vector<8x1xf32>
      %16 = vector.broadcast %15 : vector<8x1xf32> to vector<8x32xf32>
      %17 = arith.subf %11, %16 : vector<8x32xf32>
      %18 = arith.mulf %17, %17 : vector<8x32xf32>
      %cst_12 = arith.constant dense<0.000000e+00> : vector<8xf32>
      %19 = vector.multi_reduction <add>, %18, %cst_12 [1] : vector<8x32xf32> to vector<8xf32>
      %20 = vector.shape_cast %19 : vector<8xf32> to vector<8x1xf32>
      %cst_13 = arith.constant 3.200000e+01 : f32
      %21 = vector.broadcast %cst_13 : f32 to vector<8x1xf32>
      %22 = arith.divf %20, %21 : vector<8x1xf32>
      %cst_14 = arith.constant 9.99999974E-6 : f32
      %23 = vector.broadcast %cst_14 : f32 to vector<8x1xf32>
      %24 = arith.addf %22, %23 : vector<8x1xf32>
      %25 = math.rsqrt %24 : vector<8x1xf32>
      %26 = vector.broadcast %25 : vector<8x1xf32> to vector<8x32xf32>
      %27 = arith.mulf %17, %26 : vector<8x32xf32>
      %c0_15 = arith.constant 0 : index
      %c0_16 = arith.constant 0 : index
      %28 = vector.load %arg3[%c0_15, %c0_16] : memref<1x32xf32, #tpu.memory_space<vmem>>, vector<1x32xf32>
      %29 = vector.broadcast %28 : vector<1x32xf32> to vector<8x32xf32>
      %30 = arith.mulf %27, %29 : vector<8x32xf32>
      %c0_17 = arith.constant 0 : index
      %c0_18 = arith.constant 0 : index
      %31 = vector.load %arg4[%c0_17, %c0_18] : memref<1x32xf32, #tpu.memory_space<vmem>>, vector<1x32xf32>
      %32 = vector.broadcast %31 : vector<1x32xf32> to vector<8x32xf32>
      %33 = arith.addf %30, %32 : vector<8x32xf32>
      %34 = arith.truncf %33 : vector<8x32xf32> to vector<8x32xbf16>
      %c0_19 = arith.constant 0 : index
      %c0_20 = arith.constant 0 : index
      %35 = vector.load %arg8[%c0_19, %c0_20] : memref<8x32xbf16, #tpu.memory_space<vmem>>, vector<8x32xbf16>
      tpu.vector_store %arg8[%c0_19, %c0_20], %34 {strides = array<i32>} : memref<8x32xbf16, #tpu.memory_space<vmem>>, vector<8x32xbf16>,
    } else {
    }
    %c0 = arith.constant 0 : index
    %c0_1 = arith.constant 0 : index
    %3 = vector.load %arg8[%c0, %c0_1] : memref<8x32xbf16, #tpu.memory_space<vmem>>, vector<8x32xbf16>
    %c0_2 = arith.constant 0 : index
    %c0_3 = arith.constant 0 : index
    %4 = vector.load %arg5[%c0_2, %c0_3] : memref<32x384xbf16, #tpu.memory_space<vmem>>, vector<32x384xbf16>
    %cst = arith.constant dense<0.000000e+00> : vector<8x384xf32>
    %5 = tpu.matmul %3, %4, %cst {dimension_numbers = #tpu.dot_dimension_numbers<[1], [0], [0], [1], [0, 0, 1, 1], [], []>} : vector<8x32xbf16>, vector<32x384xbf16>, vector<8x384xf32> -> vector<8x384xf32>
    %c0_4 = arith.constant 0 : index
    %c0_5 = arith.constant 0 : index
    %6 = vector.load %arg6[%c0_4, %c0_5] : memref<1x384xf32, #tpu.memory_space<vmem>>, vector<1x384xf32>
    %7 = vector.broadcast %6 : vector<1x384xf32> to vector<8x384xf32>
    %8 = arith.addf %5, %7 : vector<8x384xf32>
    %c0_6 = arith.constant 0 : index
    %c0_7 = arith.constant 0 : index
    %9 = vector.load %arg7[%c0_6, %c0_7] : memref<8x384xf32, #tpu.memory_space<vmem>>, vector<8x384xf32>
    tpu.vector_store %arg7[%c0_6, %c0_7], %8 {strides = array<i32>} : memref<8x384xf32, #tpu.memory_space<vmem>>, vector<8x384xf32>,
    return
  }
  func.func @transform_0(%arg0: i32, %arg1: i32) -> (i32, i32) {
    %c0_i32 = arith.constant 0 : i32
    %c0_i32_0 = arith.constant 0 : i32
    return %arg0, %c0_i32 : i32, i32
  }
  func.func @transform_1(%arg0: i32, %arg1: i32) -> (i32, i32) {
    %c0_i32 = arith.constant 0 : i32
    %c0_i32_0 = arith.constant 0 : i32
    %c0_i32_1 = arith.constant 0 : i32
    return %c0_i32, %c0_i32_0 : i32, i32
  }
  func.func @transform_2(%arg0: i32, %arg1: i32) -> (i32, i32) {
    %c0_i32 = arith.constant 0 : i32
    %c0_i32_0 = arith.constant 0 : i32
    %c0_i32_1 = arith.constant 0 : i32
    return %c0_i32, %c0_i32_0 : i32, i32
  }
  func.func @transform_3(%arg0: i32, %arg1: i32) -> (i32, i32) {
    %c0_i32 = arith.constant 0 : i32
    %c0_i32_0 = arith.constant 0 : i32
    return %c0_i32, %arg1 : i32, i32
  }
  func.func @transform_4(%arg0: i32, %arg1: i32) -> (i32, i32) {
    %c0_i32 = arith.constant 0 : i32
    %c0_i32_0 = arith.constant 0 : i32
    return %c0_i32, %arg1 : i32, i32
  }
  func.func @transform_5(%arg0: i32, %arg1: i32) -> (i32, i32) {
    %c0_i32 = arith.constant 0 : i32
    return %arg0, %arg1 : i32, i32
  }
}

</mosaic_0001>

<llo_original>
// kernel: _lambda_.13
$region0: #{_lambda_.13}
  #allocation0 [shape = 'u32[]', space=smem, size = 0x4, offset = 0x4, fixed_abs, tag = 'smem constant byte address 0x4 - core index']
  #allocation1 [shape = 'u32[72,128]{1,0:T(1,128)}', space=vmem, size = 0x9000, scoped, tag = 'internal scratch']
  #allocation2 [shape = 'f32[24,32]{1,0:T(8,128)}', space=vmem, size = 0x3000, scoped, tag = 'scratch operand']
  %s0 = inlined_call_operand.vmem [shape: bf16[24,32], index: 0, kind: input, shape index: {}]
  %s1 = inlined_call_operand.vmem [shape: bf16[32,32], index: 1, kind: input, shape index: {}]
  %s2 = inlined_call_operand.vmem [shape: f32[1,32], index: 2, kind: input, shape index: {}]
  %s3 = inlined_call_operand.vmem [shape: bf16[24,32], index: 3, kind: input, shape index: {}]
  %s4 = inlined_call_operand.vmem [shape: bf16[24,32], index: 4, kind: output, shape index: {}]
  %s5 = sld [smem:[#allocation0]]
  $region34: #{_lambda_.13} parent=0
    _
  %s7 = ssub.s32 1, %s5
  %s8 = scalar_select 0, %s7, %s5
  // Predicated region
  $region2: #{_lambda_.13} parent=0 // pred_check
    _
  $region3: #{_lambda_.13} parent=0 // pred_check_branch
    %10 = sbr.rel (0) target = $region5
  $region4: #{_lambda_.13} parent=0 // pred_region
    _
  $region5: #{_lambda_.13} parent=0 // pred_fallthru
    _
  // Predicated region
  $region6: #{_lambda_.13} parent=0 // pred_check
    _
  $region7: #{_lambda_.13} parent=0 // pred_check_branch
    %12 = sbr.rel (0) target = $region9
  $region8: #{_lambda_.13} parent=0 // pred_region
    _
  $region9: #{_lambda_.13} parent=0 // pred_fallthru
    _
  // Predicated region
  $region10: #{_lambda_.13} parent=0 // pred_check
    _
  $region11: #{_lambda_.13} parent=0 // pred_check_branch
    %14 = sbr.rel (0) target = $region13
  $region12: #{_lambda_.13} parent=0 // pred_region
    _
  $region13: #{_lambda_.13} parent=0 // pred_fallthru
    _
  // Predicated region
  $region14: #{_lambda_.13} parent=0 // pred_check
    _
  $region15: #{_lambda_.13} parent=0 // pred_check_branch
    %16 = sbr.rel (0) target = $region17
  $region16: #{_lambda_.13} parent=0 // pred_region
    _
  $region17: #{_lambda_.13} parent=0 // pred_fallthru
    _
  %p18 = scmp.eq.s32.totalorder 0, 0
  // Predicated region
  $region18: #{_lambda_.13} parent=0 // pred_check
    %p19 = pneg %p18
  $region19: #{_lambda_.13} parent=0 // pred_check_branch
    %21 = sbr.rel (%p19) target = $region21
  $region20: #{_lambda_.13} parent=0 // pred_region
    %vm22 = vcmask 261120
    %23 = vst.msk [vmem:[#allocation2] sm:$0xff] %vm22, 0.0
    %24 = vst.msk [vmem:[#allocation2 + $0x8] sm:$0xff] %vm22, 0.0
    %25 = vst.msk [vmem:[#allocation2 + $0x10] sm:$0xff] %vm22, 0.0
  $region21: #{_lambda_.13} parent=0 // pred_fallthru
    _
  %v26 = vld [vmem:[#allocation2] sm:$0xff]
  %v27 = vld [vmem:[#allocation2 + $0x8] sm:$0xff]
  %v28 = vld [vmem:[#allocation2 + $0x10] sm:$0xff]
  %v29 = vld [vmem:[%s0] sm:$0xf]
  %v30 = vld [vmem:[%s0 + $0x4] sm:$0xf]
  %v31 = vld [vmem:[%s0 + $0x8] sm:$0xf]
  %v32 = vld [vmem:[%s1] sm:$0xf]
  %v33 = vld [vmem:[%s1 + $0x4] sm:$0xf]
  %v34 = vld [vmem:[%s1 + $0x8] sm:$0xf]
  %v35 = vld [vmem:[%s1 + $0xc] sm:$0xf]
  %v39 = vunpack.c.l.b16 %v29
  %v40 = vunpack.c.l.b16 %v30
  %v41 = vunpack.c.l.b16 %v31
  %v42 = vpack.c.b16 %v40, %v39
  %v43 = vpack.c.b16 %v41, %v41
  %v48 = vunpack.c.l.b16 %v32
  %v49 = vunpack.c.l.b16 %v33
  %v50 = vunpack.c.l.b16 %v34
  %v51 = vunpack.c.l.b16 %v35
  %v52 = vpack.c.b16 %v49, %v48
  %v53 = vpack.c.b16 %v51, %v50
  %vm56 = vcmask 261120
  %v58 = vsel %vm56, %v42, 0
  %v61 = vsel %vm56, %v43, 0
  %63 = vmatpush.bf16.msra.mxu0 0
  %64 = vmatpush.bf16.msra.mxu0 0
  %65 = vmatpush.bf16.msra.mxu0 0
  %66 = vmatpush.bf16.msra.mxu0 0
  %67 = vmatpush.bf16.msra.mxu0 0
  %68 = vmatpush.bf16.msra.mxu0 0
  %69 = vmatpush.bf16.msra.mxu0 %v53
  %70 = vmatpush.bf16.msra.mxu0 %v52
  %71 = vmatmul.bf16.gmra.mxu0 %v58
  %v72 = vpop.f32.mrf.mxu0
  %v73 = vadd.f32 0.0, %v72
  %v74 = vpop.f32.mrf.mxu0
  %v75 = vadd.f32 0.0, %v74
  %76 = vmatmul.bf16.gmra.mxu0 %v61
  %v77 = vpop.f32.mrf.mxu0
  %v78 = vadd.f32 0.0, %v77
  %v79 = vpop.f32.mrf.mxu0
  %80 = vdwg.mxu0
  %v81 = vadd.f32 %v26, %v73
  %v82 = vadd.f32 %v27, %v75
  %v83 = vadd.f32 %v28, %v78
  %84 = vst.msk [vmem:[#allocation2] sm:$0xff] %vm56, %v81
  %85 = vst.msk [vmem:[#allocation2 + $0x8] sm:$0xff] %vm56, %v82
  %86 = vst.msk [vmem:[#allocation2 + $0x10] sm:$0xff] %vm56, %v83
  // Predicated region
  $region22: #{_lambda_.13} parent=0 // pred_check
    %p87 = pneg %p18
  $region23: #{_lambda_.13} parent=0 // pred_check_branch
    %89 = sbr.rel (%p87) target = $region25
  $region24: #{_lambda_.13} parent=0 // pred_region
    %v90 = vld [vmem:[#allocation2] sm:$0xff]
    %v91 = vld [vmem:[#allocation2 + $0x8] sm:$0xff]
    %v92 = vld [vmem:[#allocation2 + $0x10] sm:$0xff]
    %v93 = vld [vmem:[%s2] sm:$0x1]
    %v95 = vperm.slane %v93, 0
    %v97 = vadd.f32 %v90, %v95
    %v98 = vadd.f32 %v91, %v95
    %v99 = vadd.f32 %v92, %v95
    %v100 = vld [vmem:[%s3] sm:$0xf]
    %v101 = vld [vmem:[%s3 + $0x4] sm:$0xf]
    %v102 = vld [vmem:[%s3 + $0x8] sm:$0xf]
    %v103 = vunpack.c.l.bf16 %v100
    %v104 = vunpack.c.l.bf16 %v101
    %v105 = vunpack.c.l.bf16 %v102
    %v106 = vadd.f32 %v97, %v103
    %v107 = vadd.f32 %v98, %v104
    %v108 = vadd.f32 %v99, %v105
    %v109 = vpack.c.bf16 %v106, %v106
    %v110 = vpack.c.bf16 %v107, %v107
    %v111 = vpack.c.bf16 %v108, %v108
    %vm112 = vcmask 257024
    %113 = vst.msk [vmem:[%s4] sm:$0xf] %vm112, %v109
    %114 = vst.msk [vmem:[%s4 + $0x4] sm:$0xf] %vm112, %v110
    %115 = vst.msk [vmem:[%s4 + $0x8] sm:$0xf] %vm112, %v111
  $region25: #{_lambda_.13} parent=0 // pred_fallthru
    _
  // Predicated region
  $region26: #{_lambda_.13} parent=0 // pred_check
    _
  $region27: #{_lambda_.13} parent=0 // pred_check_branch
    %117 = sbr.rel (0) target = $region29
  $region28: #{_lambda_.13} parent=0 // pred_region
    _
  $region29: #{_lambda_.13} parent=0 // pred_fallthru
    _
  // Predicated region
  $region30: #{_lambda_.13} parent=0 // pred_check
    _
  $region31: #{_lambda_.13} parent=0 // pred_check_branch
    %119 = sbr.rel (0) target = $region33
  $region32: #{_lambda_.13} parent=0 // pred_region
    _
  $region33: #{_lambda_.13} parent=0 // pred_fallthru
    _

// kernel: _lambda_.11
$region0: #{_lambda_.11}
  #allocation0 [shape = 'u32[]', space=smem, size = 0x4, offset = 0x4, fixed_abs, tag = 'smem constant byte address 0x4 - core index']
  #allocation1 [shape = 'u32[72,128]{1,0:T(1,128)}', space=vmem, size = 0x9000, scoped, tag = 'internal scratch']
  #allocation2 [shape = 'bf16[24,32]{1,0:T(8,128)(2,1)}', space=vmem, size = 0x1800, scoped, tag = 'scratch operand']
  %s0 = inlined_call_operand.vmem [shape: bf16[24,32], index: 0, kind: input, shape index: {}]
  %s1 = inlined_call_operand.vmem [shape: f32[1,32], index: 1, kind: input, shape index: {}]
  %s2 = inlined_call_operand.vmem [shape: f32[1,32], index: 2, kind: input, shape index: {}]
  %s3 = inlined_call_operand.vmem [shape: bf16[32,96], index: 3, kind: input, shape index: {}]
  %s4 = inlined_call_operand.vmem [shape: f32[1,96], index: 4, kind: input, shape index: {}]
  %s5 = inlined_call_operand.vmem [shape: bf16[24,96], index: 5, kind: output, shape index: {}]
  %s6 = sld [smem:[#allocation0]]
  $region34: #{_lambda_.11} parent=0
    _
  %s8 = ssub.s32 1, %s6
  %s9 = scalar_select 0, %s8, %s6
  // Predicated region
  $region2: #{_lambda_.11} parent=0 // pred_check
    _
  $region3: #{_lambda_.11} parent=0 // pred_check_branch
    %11 = sbr.rel (0) target = $region5
  $region4: #{_lambda_.11} parent=0 // pred_region
    _
  $region5: #{_lambda_.11} parent=0 // pred_fallthru
    _
  // Predicated region
  $region6: #{_lambda_.11} parent=0 // pred_check
    _
  $region7: #{_lambda_.11} parent=0 // pred_check_branch
    %13 = sbr.rel (0) target = $region9
  $region8: #{_lambda_.11} parent=0 // pred_region
    _
  $region9: #{_lambda_.11} parent=0 // pred_fallthru
    _
  // Predicated region
  $region10: #{_lambda_.11} parent=0 // pred_check
    _
  $region11: #{_lambda_.11} parent=0 // pred_check_branch
    %15 = sbr.rel (0) target = $region13
  $region12: #{_lambda_.11} parent=0 // pred_region
    _
  $region13: #{_lambda_.11} parent=0 // pred_fallthru
    _
  // Predicated region
  $region14: #{_lambda_.11} parent=0 // pred_check
    _
  $region15: #{_lambda_.11} parent=0 // pred_check_branch
    %17 = sbr.rel (0) target = $region17
  $region16: #{_lambda_.11} parent=0 // pred_region
    _
  $region17: #{_lambda_.11} parent=0 // pred_fallthru
    _
  // Predicated region
  $region18: #{_lambda_.11} parent=0 // pred_check
    _
  $region19: #{_lambda_.11} parent=0 // pred_check_branch
    %19 = sbr.rel (0) target = $region21
  $region20: #{_lambda_.11} parent=0 // pred_region
    _
  $region21: #{_lambda_.11} parent=0 // pred_fallthru
    _
  %p21 = scmp.eq.s32.totalorder 0, 0
  // Predicated region
  $region22: #{_lambda_.11} parent=0 // pred_check
    %p22 = pneg %p21
  $region23: #{_lambda_.11} parent=0 // pred_check_branch
    %24 = sbr.rel (%p22) target = $region25
  $region24: #{_lambda_.11} parent=0 // pred_region
    %v25 = vld [vmem:[%s0] sm:$0xf]
    %v26 = vld [vmem:[%s0 + $0x4] sm:$0xf]
    %v27 = vld [vmem:[%s0 + $0x8] sm:$0xf]
    %v28 = vunpack.c.l.bf16 %v25
    %v29 = vunpack.c.l.bf16 %v26
    %v30 = vunpack.c.l.bf16 %v27
    %vm31 = vcmask 261120
    %v32 = vsel %vm31, %v28, 0.0
    %33 = vadd.xlane.f32.xlu0 %v32
    %v34 = vpop.xlane.xlu0 %33
    %v35 = vsel %vm31, %v29, 0.0
    %36 = vadd.xlane.f32.xlu0 %v35
    %v37 = vpop.xlane.xlu0 %36
    %v38 = vsel %vm31, %v30, 0.0
    %39 = vadd.xlane.f32.xlu0 %v38
    %v40 = vpop.xlane.xlu0 %39
    %v41 = vrcp.pop 32.0
    %v42 = vmul.f32 32.0, %v41
    %v43 = vsub.f32 1.0, %v42
    %v44 = vmul.f32 %v41, %v43
    %v45 = vadd.f32 %v41, %v44
    %vm46 = vweird.f32 %v41
    %v47 = vsel %vm46, %v41, %v45
    %v48 = vmul.f32 %v34, %v47
    %v49 = vmul.f32 %v37, %v47
    %v50 = vmul.f32 %v40, %v47
    %v51 = vsub.f32 %v28, %v48
    %v52 = vsub.f32 %v29, %v49
    %v53 = vsub.f32 %v30, %v50
    %v54 = vmul.f32 %v51, %v51
    %v55 = vmul.f32 %v52, %v52
    %v56 = vmul.f32 %v53, %v53
    %v57 = vsel %vm31, %v54, 0.0
    %58 = vadd.xlane.f32.xlu0 %v57
    %v59 = vpop.xlane.xlu0 %58
    %v60 = vsel %vm31, %v55, 0.0
    %61 = vadd.xlane.f32.xlu0 %v60
    %v62 = vpop.xlane.xlu0 %61
    %v63 = vsel %vm31, %v56, 0.0
    %64 = vadd.xlane.f32.xlu0 %v63
    %v65 = vpop.xlane.xlu0 %64
    %v66 = vmul.f32 %v59, %v47
    %v67 = vmul.f32 %v62, %v47
    %v68 = vmul.f32 %v65, %v47
    %v69 = vadd.f32 %v66, 1e-05
    %v70 = vadd.f32 %v67, 1e-05
    %v71 = vadd.f32 %v68, 1e-05
    %v72 = vrsqrt.pop %v69
    %v73 = vmul.f32 %v72, %v69
    %v74 = vmul.f32 %v73, %v72
    %v75 = vmul.f32 0.5, %v74
    %v76 = vsub.f32 1.5, %v75
    %v77 = vmul.f32 %v72, %v76
    %vm78 = vweird.f32 %v69
    %vm79 = vweird.f32 %v72
    %vm80 = vmor %vm78, %vm79
    %v81 = vsel %vm80, %v72, %v77
    %v82 = vrsqrt.pop %v70
    %v83 = vmul.f32 %v82, %v70
    %v84 = vmul.f32 %v83, %v82
    %v85 = vmul.f32 0.5, %v84
    %v86 = vsub.f32 1.5, %v85
    %v87 = vmul.f32 %v82, %v86
    %vm88 = vweird.f32 %v70
    %vm89 = vweird.f32 %v82
    %vm90 = vmor %vm88, %vm89
    %v91 = vsel %vm90, %v82, %v87
    %v92 = vrsqrt.pop %v71
    %v93 = vmul.f32 %v92, %v71
    %v94 = vmul.f32 %v93, %v92
    %v95 = vmul.f32 0.5, %v94
    %v96 = vsub.f32 1.5, %v95
    %v97 = vmul.f32 %v92, %v96
    %vm98 = vweird.f32 %v71
    %vm99 = vweird.f32 %v92
    %vm100 = vmor %vm98, %vm99
    %v101 = vsel %vm100, %v92, %v97
    %v102 = vmul.f32 %v51, %v81
    %v103 = vmul.f32 %v52, %v91
    %v104 = vmul.f32 %v53, %v101
    %v105 = vld [vmem:[%s1] sm:$0x1]
    %v107 = vperm.slane %v105, 0
    %v109 = vmul.f32 %v102, %v107
    %v110 = vmul.f32 %v103, %v107
    %v111 = vmul.f32 %v104, %v107
    %v112 = vld [vmem:[%s2] sm:$0x1]
    %v114 = vperm.slane %v112, 0
    %v116 = vadd.f32 %v109, %v114
    %v117 = vadd.f32 %v110, %v114
    %v118 = vadd.f32 %v111, %v114
    %v119 = vpack.c.bf16 %v116, %v116
    %v120 = vpack.c.bf16 %v117, %v117
    %v121 = vpack.c.bf16 %v118, %v118
    %vm122 = vcmask 257024
    %123 = vst.msk [vmem:[#allocation2] sm:$0xf] %vm122, %v119
    %124 = vst.msk [vmem:[#allocation2 + $0x4] sm:$0xf] %vm122, %v120
    %125 = vst.msk [vmem:[#allocation2 + $0x8] sm:$0xf] %vm122, %v121
  $region25: #{_lambda_.11} parent=0 // pred_fallthru
    _
  %v126 = vld [vmem:[#allocation2] sm:$0xf]
  %v127 = vld [vmem:[#allocation2 + $0x4] sm:$0xf]
  %v128 = vld [vmem:[#allocation2 + $0x8] sm:$0xf]
  %v129 = vld [vmem:[%s3] sm:$0xf]
  %v130 = vld [vmem:[%s3 + $0x4] sm:$0xf]
  %v131 = vld [vmem:[%s3 + $0x8] sm:$0xf]
  %v132 = vld [vmem:[%s3 + $0xc] sm:$0xf]
  %v133 = vld [vmem:[%s4] sm:$0x1]
  %v135 = vperm.slane %v133, 0
  %v140 = vunpack.c.l.b16 %v126
  %v141 = vunpack.c.l.b16 %v127
  %v142 = vunpack.c.l.b16 %v128
  %v143 = vpack.c.b16 %v141, %v140
  %v144 = vpack.c.b16 %v142, %v142
  %v149 = vunpack.c.l.b16 %v129
  %v150 = vunpack.c.l.b16 %v130
  %v151 = vunpack.c.l.b16 %v131
  %v152 = vunpack.c.l.b16 %v132
  %v153 = vpack.c.b16 %v150, %v149
  %v154 = vpack.c.b16 %v152, %v151
  %vm157 = vcmask 261120
  %v159 = vsel %vm157, %v143, 0
  %v162 = vsel %vm157, %v144, 0
  %164 = vmatpush.bf16.msra.mxu0 0
  %165 = vmatpush.bf16.msra.mxu0 0
  %166 = vmatpush.bf16.msra.mxu0 0
  %167 = vmatpush.bf16.msra.mxu0 0
  %168 = vmatpush.bf16.msra.mxu0 0
  %169 = vmatpush.bf16.msra.mxu0 0
  %170 = vmatpush.bf16.msra.mxu0 %v154
  %171 = vmatpush.bf16.msra.mxu0 %v153
  %172 = vmatmul.bf16.gmra.mxu0 %v159
  %v173 = vpop.f32.mrf.mxu0
  %v174 = vadd.f32 %v135, %v173
  %v175 = vpop.f32.mrf.mxu0
  %v176 = vadd.f32 %v135, %v175
  %177 = vmatmul.bf16.gmra.mxu0 %v162
  %v178 = vpop.f32.mrf.mxu0
  %v179 = vadd.f32 %v135, %v178
  %v180 = vpop.f32.mrf.mxu0
  %181 = vdwg.mxu0
  %v182 = vpack.c.bf16 %v174, %v174
  %v183 = vpack.c.bf16 %v176, %v176
  %v184 = vpack.c.bf16 %v179, %v179
  %vm185 = vcmask 781312
  %186 = vst.msk [vmem:[%s5] sm:$0xf] %vm185, %v182
  %187 = vst.msk [vmem:[%s5 + $0x4] sm:$0xf] %vm185, %v183
  %188 = vst.msk [vmem:[%s5 + $0x8] sm:$0xf] %vm185, %v184
  // Predicated region
  $region26: #{_lambda_.11} parent=0 // pred_check
    _
  $region27: #{_lambda_.11} parent=0 // pred_check_branch
    %190 = sbr.rel (0) target = $region29
  $region28: #{_lambda_.11} parent=0 // pred_region
    _
  $region29: #{_lambda_.11} parent=0 // pred_fallthru
    _
  // Predicated region
  $region30: #{_lambda_.11} parent=0 // pred_check
    _
  $region31: #{_lambda_.11} parent=0 // pred_check_branch
    %192 = sbr.rel (0) target = $region33
  $region32: #{_lambda_.11} parent=0 // pred_region
    _
  $region33: #{_lambda_.11} parent=0 // pred_fallthru
    _

// kernel: _lambda_.10
$region0: #{_lambda_.10}
  #allocation0 [shape = 'u32[]', space=smem, size = 0x4, offset = 0x4, fixed_abs, tag = 'smem constant byte address 0x4 - core index']
  #allocation1 [shape = 'u32[72,128]{1,0:T(1,128)}', space=vmem, size = 0x9000, scoped, tag = 'internal scratch']
  #allocation2 [shape = 'f32[16,32]{1,0:T(8,128)}', space=vmem, size = 0x2000, scoped, tag = 'scratch operand']
  %s0 = inlined_call_operand.vmem [shape: bf16[16,12], index: 0, kind: input, shape index: {}]
  %s1 = inlined_call_operand.vmem [shape: bf16[12,32], index: 1, kind: input, shape index: {}]
  %s2 = inlined_call_operand.vmem [shape: f32[1,32], index: 2, kind: input, shape index: {}]
  %s3 = inlined_call_operand.vmem [shape: bf16[16,32], index: 3, kind: output, shape index: {}]
  %s4 = sld [smem:[#allocation0]]
  $region30: #{_lambda_.10} parent=0
    _
  %s6 = ssub.s32 1, %s4
  %s7 = scalar_select 0, %s6, %s4
  // Predicated region
  $region2: #{_lambda_.10} parent=0 // pred_check
    _
  $region3: #{_lambda_.10} parent=0 // pred_check_branch
    %9 = sbr.rel (0) target = $region5
  $region4: #{_lambda_.10} parent=0 // pred_region
    _
  $region5: #{_lambda_.10} parent=0 // pred_fallthru
    _
  // Predicated region
  $region6: #{_lambda_.10} parent=0 // pred_check
    _
  $region7: #{_lambda_.10} parent=0 // pred_check_branch
    %11 = sbr.rel (0) target = $region9
  $region8: #{_lambda_.10} parent=0 // pred_region
    _
  $region9: #{_lambda_.10} parent=0 // pred_fallthru
    _
  // Predicated region
  $region10: #{_lambda_.10} parent=0 // pred_check
    _
  $region11: #{_lambda_.10} parent=0 // pred_check_branch
    %13 = sbr.rel (0) target = $region13
  $region12: #{_lambda_.10} parent=0 // pred_region
    _
  $region13: #{_lambda_.10} parent=0 // pred_fallthru
    _
  %p15 = scmp.eq.s32.totalorder 0, 0
  // Predicated region
  $region14: #{_lambda_.10} parent=0 // pred_check
    %p16 = pneg %p15
  $region15: #{_lambda_.10} parent=0 // pred_check_branch
    %18 = sbr.rel (%p16) target = $region17
  $region16: #{_lambda_.10} parent=0 // pred_region
    %vm19 = vcmask 261120
    %20 = vst.msk [vmem:[#allocation2] sm:$0xff] %vm19, 0.0
    %21 = vst.msk [vmem:[#allocation2 + $0x8] sm:$0xff] %vm19, 0.0
  $region17: #{_lambda_.10} parent=0 // pred_fallthru
    _
  %v22 = vld [vmem:[#allocation2] sm:$0xff]
  %v23 = vld [vmem:[#allocation2 + $0x8] sm:$0xff]
  %v24 = vld [vmem:[%s0] sm:$0xf]
  %v25 = vld [vmem:[%s0 + $0x4] sm:$0xf]
  %v26 = vld [vmem:[%s1] sm:$0xf]
  %v27 = vld [vmem:[%s1 + $0x4] sm:$0x3]
  %v30 = vunpack.c.l.b16 %v24
  %v31 = vunpack.c.l.b16 %v25
  %v32 = vpack.c.b16 %v31, %v30
  %v35 = vunpack.c.l.b16 %v26
  %v36 = vunpack.c.l.b16 %v27
  %v37 = vpack.c.b16 %v36, %v35
  %vm38 = vcmask 97280
  %v40 = vsel %vm38, %v32, 0
  %vm42 = vcmask 1045504
  %v44 = vsel %vm42, %v37, 0
  %46 = vmatpush.bf16.msra.mxu0 0
  %47 = vmatpush.bf16.msra.mxu0 0
  %48 = vmatpush.bf16.msra.mxu0 0
  %49 = vmatpush.bf16.msra.mxu0 0
  %50 = vmatpush.bf16.msra.mxu0 0
  %51 = vmatpush.bf16.msra.mxu0 0
  %52 = vmatpush.bf16.msra.mxu0 0
  %53 = vmatpush.bf16.msra.mxu0 %v44
  %54 = vmatmul.bf16.gmra.mxu0 %v40
  %v55 = vpop.f32.mrf.mxu0
  %v56 = vadd.f32 0.0, %v55
  %v57 = vpop.f32.mrf.mxu0
  %v58 = vadd.f32 0.0, %v57
  %59 = vdwg.mxu0
  %v60 = vadd.f32 %v22, %v56
  %v61 = vadd.f32 %v23, %v58
  %vm62 = vcmask 261120
  %63 = vst.msk [vmem:[#allocation2] sm:$0xff] %vm62, %v60
  %64 = vst.msk [vmem:[#allocation2 + $0x8] sm:$0xff] %vm62, %v61
  // Predicated region
  $region18: #{_lambda_.10} parent=0 // pred_check
    %p65 = pneg %p15
  $region19: #{_lambda_.10} parent=0 // pred_check_branch
    %67 = sbr.rel (%p65) target = $region21
  $region20: #{_lambda_.10} parent=0 // pred_region
    %v68 = vld [vmem:[#allocation2] sm:$0xff]
    %v69 = vld [vmem:[#allocation2 + $0x8] sm:$0xff]
    %v70 = vld [vmem:[%s2] sm:$0x1]
    %v72 = vperm.slane %v70, 0
    %v74 = vadd.f32 %v68, %v72
    %v75 = vadd.f32 %v69, %v72
    %v76 = vpack.c.bf16 %v74, %v74
    %v77 = vpack.c.bf16 %v75, %v75
    %vm78 = vcmask 257024
    %79 = vst.msk [vmem:[%s3] sm:$0xf] %vm78, %v76
    %80 = vst.msk [vmem:[%s3 + $0x4] sm:$0xf] %vm78, %v77
  $region21: #{_lambda_.10} parent=0 // pred_fallthru
    _
  // Predicated region
  $region22: #{_lambda_.10} parent=0 // pred_check
    _
  $region23: #{_lambda_.10} parent=0 // pred_check_branch
    %82 = sbr.rel (0) target = $region25
  $region24: #{_lambda_.10} parent=0 // pred_region
    _
  $region25: #{_lambda_.10} parent=0 // pred_fallthru
    _
  // Predicated region
  $region26: #{_lambda_.10} parent=0 // pred_check
    _
  $region27: #{_lambda_.10} parent=0 // pred_check_branch
    %84 = sbr.rel (0) target = $region29
  $region28: #{_lambda_.10} parent=0 // pred_region
    _
  $region29: #{_lambda_.10} parent=0 // pred_fallthru
    _

// kernel: _lambda_.12
$region0: #{_lambda_.12}
  #allocation0 [shape = 'u32[]', space=smem, size = 0x4, offset = 0x4, fixed_abs, tag = 'smem constant byte address 0x4 - core index']
  #allocation1 [shape = 'u32[72,128]{1,0:T(1,128)}', space=vmem, size = 0x9000, scoped, tag = 'internal scratch']
  %s0 = inlined_call_operand.vmem [shape: bf16[2,12,96], index: 0, kind: input, shape index: {}]
  %s1 = inlined_call_operand.vmem [shape: bf16[2,12,32], index: 1, kind: output, shape index: {}]
  %s2 = sld [smem:[#allocation0]]
  $region37: #{_lambda_.12} parent=0
    _
  %s4 = ssub.s32 1, %s2
  %s5 = scalar_select 0, %s4, %s2
  loop: start=0, step=1, limit=4
  $region2: #{_lambda_.12} parent=0 // loop_pre_header
    _
  $region3: #{_lambda_.12} parent=0 // loop_header
    %s7 = sphi 0, %s11
    %p8 = scmp.ge.s32.totalorder %s7, 4
    %s17 = sphi 0, %s19
    %s20 = sphi 0, %s17
    %s21 = sphi 0, %s20
    %s37 = sphi 0, %s21
    %s43 = sphi 0, %s45
    %s46 = sphi 0, %s43
    %s47 = sphi 0, %s46
    %s63 = sphi 0, %s47
  $region4: #{_lambda_.12} parent=0 // loop_header_branch
    %10 = sbr.rel (%p8) target = $region8
  $region5: #{_lambda_.12} parent=0 // loop_body
    %s12 = ssub.s32 %s7, 1
    %s13 = ssub.s32 %s7, 2
    %s14 = sadd.s32 %s7, 1
    %s15 = ssub.s32 %s7, %s14
    %p16 = scmp.eq.s32.totalorder %s15, 0
    %s18 = sadd.s32 %s17, 1
    %s19 = scalar_select %p16, %s17, %s18
    %p22 = pneg %p16
    %p23 = scmp.eq.s32.totalorder %s7, 1
    %p24 = por %p22, %p23
    %p25 = scmp.ne.s32.totalorder %s17, %s20
    %p26 = scmp.eq.s32.totalorder %s7, 0
    %p27 = por %p25, %p26
    %p28 = scmp.ne.s32.totalorder %s17, %s20
    %p29 = scmp.eq.s32.totalorder %s12, 1
    %p30 = por %p28, %p29
    %p31 = scmp.ne.s32.totalorder %s20, %s21
    %p32 = scmp.eq.s32.totalorder %s12, 0
    %p33 = por %p31, %p32
    %p34 = scmp.ne.s32.totalorder %s20, %s21
    %p35 = scmp.eq.s32.totalorder %s13, 1
    %p36 = por %p34, %p35
    %p38 = scmp.ne.s32.totalorder %s21, %s37
    %p39 = scmp.eq.s32.totalorder %s13, 0
    %p40 = por %p38, %p39
    %s41 = ssub.s32 %s7, %s14
    %p42 = scmp.eq.s32.totalorder %s41, 0
    %s44 = sadd.s32 %s43, 1
    %s45 = scalar_select %p42, %s43, %s44
    %p48 = pneg %p42
    %p49 = scmp.eq.s32.totalorder %s7, 1
    %p50 = por %p48, %p49
    %p51 = scmp.ne.s32.totalorder %s43, %s46
    %p52 = scmp.eq.s32.totalorder %s7, 0
    %p53 = por %p51, %p52
    %p54 = scmp.ne.s32.totalorder %s43, %s46
    %p55 = scmp.eq.s32.totalorder %s12, 1
    %p56 = por %p54, %p55
    %p57 = scmp.ne.s32.totalorder %s46, %s47
    %p58 = scmp.eq.s32.totalorder %s12, 0
    %p59 = por %p57, %p58
    %p60 = scmp.ne.s32.totalorder %s46, %s47
    %p61 = scmp.eq.s32.totalorder %s13, 1
    %p62 = por %p60, %p61
    %p64 = scmp.ne.s32.totalorder %s47, %s63
    %p65 = scmp.eq.s32.totalorder %s13, 0
    %p66 = por %p64, %p65
    %p67 = scmp.le.s32.totalorder 1, %s7
    %p68 = scmp.lt.s32.totalorder %s7, 3
    %p69 = pnand %p67, %p68
    %p70 = pneg %p69
    // Predicated region
    $region9: #{_lambda_.12} parent=5 // pred_check
      _
    $region10: #{_lambda_.12} parent=5 // pred_check_branch
      %72 = sbr.rel (%p69) target = $region12
    $region11: #{_lambda_.12} parent=5 // pred_region
      %s73 = ssub.s32 %s7, 1
    $region12: #{_lambda_.12} parent=5 // pred_fallthru
      _
    %p74 = scmp.lt.s32.totalorder %s7, 2
    // Predicated region
    $region13: #{_lambda_.12} parent=5 // pred_check
      %p75 = pneg %p74
    $region14: #{_lambda_.12} parent=5 // pred_check_branch
      %77 = sbr.rel (%p75) target = $region16
    $region15: #{_lambda_.12} parent=5 // pred_region
      // Predicated region
      $region17: #{_lambda_.12} parent=15 // pred_check
        %p78 = pneg %p27
      $region18: #{_lambda_.12} parent=15 // pred_check_branch
        %80 = sbr.rel (%p78) target = $region20
      $region19: #{_lambda_.12} parent=15 // pred_region
        %p81 = scmp.lt.s32.totalorder %s7, 1
        %s82 = scalar_select %p81, %s7, 1
        %s83 = smul.addr %s82, 2
        %s84 = smul.addr %s83, 4
        %s85 = scalar_lea.vmem %s0, %s84
      $region20: #{_lambda_.12} parent=15 // pred_fallthru
        _
    $region16: #{_lambda_.12} parent=5 // pred_fallthru
      _
    %p86 = scmp.le.s32.totalorder 1, %s7
    %p87 = scmp.lt.s32.totalorder %s7, 3
    %p88 = pnand %p86, %p87
    %p89 = pneg %p88
    // Predicated region
    $region21: #{_lambda_.12} parent=5 // pred_check
      _
    $region22: #{_lambda_.12} parent=5 // pred_check_branch
      %91 = sbr.rel (%p88) target = $region24
    $region23: #{_lambda_.12} parent=5 // pred_region
      %s92 = ssub.s32 %s7, 1
      %p93 = scmp.lt.s32.totalorder %s12, 1
      %s94 = scalar_select %p93, %s12, 1
      %s95 = smul.addr %s94, 2
      %s96 = smul.addr %s95, 4
      %s97 = scalar_lea.vmem %s0, %s96
      %p98 = pneg %p33
      %p99 = pneg %p30
      %p100 = pneg %p59
      %p101 = pneg %p56
      %p102 = scmp.lt.s32.totalorder %s12, 1
      %s103 = scalar_select %p102, %s12, 1
      %s104 = smul.addr %s103, 2
      %s105 = smul.addr %s104, 4
      %s106 = scalar_lea.vmem %s1, %s105
      %p107 = scmp.lt.s32.totalorder %s12, 1
      %s108 = scalar_select %p107, %s12, 1
      %s109 = smul.addr %s108, 2
      %s110 = smul.addr %s109, 4
      %s111 = scalar_lea.vmem %s0, %s110
      %p112 = scmp.lt.s32.totalorder %s12, 1
      %s113 = scalar_select %p112, %s12, 1
      %s114 = smul.addr %s113, 2
      %s115 = smul.addr %s114, 4
      %s116 = scalar_lea.vmem %s1, %s115
      %v118 = vld [vmem:[%s111] sm:$0xf]
      %v119 = vld [vmem:[%s111 + $0x4] sm:$0x3]
      %v120 = vunpack.c.l.bf16 %v118
      %v121 = vunpack.c.l.bf16 %v119
      %v122 = vmul.f32 %v120, 0.35351563
      %v123 = vmul.f32 %v121, 0.35351563
      %v124 = vpack.c.bf16 %v122, %v122
      %v125 = vpack.c.bf16 %v123, %v123
      %v128 = vunpack.c.l.b16 %v124
      %v129 = vunpack.c.l.b16 %v125
      %v130 = vpack.c.b16 %v129, %v128
      %v133 = vunpack.c.l.b16 %v118
      %v134 = vunpack.c.l.b16 %v119
      %v135 = vpack.c.b16 %v134, %v133
      %136 = vrot.lane.b32.xlu0 %v135, 96
      %v137 = vpop.permute.xlu0 %136
      %vm138 = vcmask 64512
      %v140 = vsel %vm138, %v130, 0
      %v143 = vsel %vm138, %v137, 0
      %145 = vmatpush.bf16.xpose.msra.mxu0 0
      %146 = vmatpush.bf16.xpose.msra.mxu0 0
      %147 = vmatpush.bf16.xpose.msra.mxu0 0
      %148 = vmatpush.bf16.xpose.msra.mxu0 0
      %149 = vmatpush.bf16.xpose.msra.mxu0 0
      %150 = vmatpush.bf16.xpose.msra.mxu0 0
      %151 = vmatpush.bf16.xpose.msra.mxu0 0
      %152 = vmatpush.bf16.xpose.msra.mxu0 %v143
      %153 = vmatmul.bf16.gmra.mxu0 %v140
      %v154 = vpop.f32.mrf.mxu0
      %v155 = vadd.f32 0.0, %v154
      %v156 = vpop.f32.mrf.mxu0
      %v157 = vadd.f32 0.0, %v156
      %158 = vdwg.mxu0
      %vm159 = vcmask 97280
      %v160 = vsel %vm159, %v155, -inf
      %161 = vmax.xlane.f32.xlu0 %v160
      %v162 = vpop.xlane.xlu0 %161
      %vm163 = vcmask 93184
      %v164 = vsel %vm163, %v157, -inf
      %165 = vmax.xlane.f32.xlu0 %v164
      %v166 = vpop.xlane.xlu0 %165
      %v167 = vsub.f32 %v155, %v162
      %v168 = vsub.f32 %v157, %v166
      %v169 = vmul.f32 %v167, 1.442695
      %v170 = vpow.pop %v169
      %v171 = vmul.f32 %v168, 1.442695
      %v172 = vpow.pop %v171
      %v173 = vsel %vm159, %v170, 0.0
      %174 = vadd.xlane.f32.xlu0 %v173
      %v175 = vpop.xlane.xlu0 %174
      %v176 = vsel %vm163, %v172, 0.0
      %177 = vadd.xlane.f32.xlu0 %v176
      %v178 = vpop.xlane.xlu0 %177
      %v179 = vrcp.pop %v175
      %v180 = vrcp.pop %v178
      %v181 = vmul.f32 %v170, %v179
      %v182 = vmul.f32 %v172, %v180
      %v183 = vpack.c.bf16 %v182, %v181
      %184 = vrot.lane.b32.xlu0 %v135, 64
      %v185 = vpop.permute.xlu0 %184
      %v187 = vsel %vm159, %v183, 0
      %vm189 = vcmask 1045504
      %v191 = vsel %vm189, %v185, 0
      %193 = vmatpush.bf16.msra.mxu0 0
      %194 = vmatpush.bf16.msra.mxu0 0
      %195 = vmatpush.bf16.msra.mxu0 0
      %196 = vmatpush.bf16.msra.mxu0 0
      %197 = vmatpush.bf16.msra.mxu0 0
      %198 = vmatpush.bf16.msra.mxu0 0
      %199 = vmatpush.bf16.msra.mxu0 0
      %200 = vmatpush.bf16.msra.mxu0 %v191
      %201 = vmatmul.bf16.gmra.mxu0 %v187
      %v202 = vpop.f32.mrf.mxu0
      %v203 = vadd.f32 0.0, %v202
      %v204 = vpop.f32.mrf.mxu0
      %v205 = vadd.f32 0.0, %v204
      %206 = vdwg.mxu0
      %207 = vrot.lane.b32.xlu0 %v130, 120
      %v208 = vpop.permute.xlu0 %207
      %209 = vrot.lane.b32.xlu0 %v135, 88
      %v210 = vpop.permute.xlu0 %209
      %v212 = vsel %vm138, %v208, 0
      %v215 = vsel %vm138, %v210, 0
      %217 = vmatpush.bf16.xpose.msra.mxu0 0
      %218 = vmatpush.bf16.xpose.msra.mxu0 0
      %219 = vmatpush.bf16.xpose.msra.mxu0 0
      %220 = vmatpush.bf16.xpose.msra.mxu0 0
      %221 = vmatpush.bf16.xpose.msra.mxu0 0
      %222 = vmatpush.bf16.xpose.msra.mxu0 0
      %223 = vmatpush.bf16.xpose.msra.mxu0 0
      %224 = vmatpush.bf16.xpose.msra.mxu0 %v215
      %225 = vmatmul.bf16.gmra.mxu0 %v212
      %v226 = vpop.f32.mrf.mxu0
      %v227 = vadd.f32 0.0, %v226
      %v228 = vpop.f32.mrf.mxu0
      %v229 = vadd.f32 0.0, %v228
      %230 = vdwg.mxu0
      %v231 = vsel %vm159, %v227, -inf
      %232 = vmax.xlane.f32.xlu0 %v231
      %v233 = vpop.xlane.xlu0 %232
      %v234 = vsel %vm163, %v229, -inf
      %235 = vmax.xlane.f32.xlu0 %v234
      %v236 = vpop.xlane.xlu0 %235
      %v237 = vsub.f32 %v227, %v233
      %v238 = vsub.f32 %v229, %v236
      %v239 = vmul.f32 %v237, 1.442695
      %v240 = vpow.pop %v239
      %v241 = vmul.f32 %v238, 1.442695
      %v242 = vpow.pop %v241
      %v243 = vsel %vm159, %v240, 0.0
      %244 = vadd.xlane.f32.xlu0 %v243
      %v245 = vpop.xlane.xlu0 %244
      %v246 = vsel %vm163, %v242, 0.0
      %247 = vadd.xlane.f32.xlu0 %v246
      %v248 = vpop.xlane.xlu0 %247
      %v249 = vrcp.pop %v245
      %v250 = vrcp.pop %v248
      %v251 = vmul.f32 %v240, %v249
      %v252 = vmul.f32 %v242, %v250
      %v253 = vpack.c.bf16 %v252, %v251
      %254 = vrot.lane.b32.xlu0 %v135, 56
      %v255 = vpop.permute.xlu0 %254
      %v257 = vsel %vm159, %v253, 0
      %v260 = vsel %vm189, %v255, 0
      %262 = vmatpush.bf16.msra.mxu0 0
      %263 = vmatpush.bf16.msra.mxu0 0
      %264 = vmatpush.bf16.msra.mxu0 0
      %265 = vmatpush.bf16.msra.mxu0 0
      %266 = vmatpush.bf16.msra.mxu0 0
      %267 = vmatpush.bf16.msra.mxu0 0
      %268 = vmatpush.bf16.msra.mxu0 0
      %269 = vmatpush.bf16.msra.mxu0 %v260
      %270 = vmatmul.bf16.gmra.mxu0 %v257
      %v271 = vpop.f32.mrf.mxu0
      %v272 = vadd.f32 0.0, %v271
      %v273 = vpop.f32.mrf.mxu0
      %v274 = vadd.f32 0.0, %v273
      %275 = vdwg.mxu0
      %276 = vrot.lane.b32.xlu0 %v130, 112
      %v277 = vpop.permute.xlu0 %276
      %278 = vrot.lane.b32.xlu0 %v135, 80
      %v279 = vpop.permute.xlu0 %278
      %v281 = vsel %vm138, %v277, 0
      %v284 = vsel %vm138, %v279, 0
      %286 = vmatpush.bf16.xpose.msra.mxu0 0
      %287 = vmatpush.bf16.xpose.msra.mxu0 0
      %288 = vmatpush.bf16.xpose.msra.mxu0 0
      %289 = vmatpush.bf16.xpose.msra.mxu0 0
      %290 = vmatpush.bf16.xpose.msra.mxu0 0
      %291 = vmatpush.bf16.xpose.msra.mxu0 0
      %292 = vmatpush.bf16.xpose.msra.mxu0 0
      %293 = vmatpush.bf16.xpose.msra.mxu0 %v284
      %294 = vmatmul.bf16.gmra.mxu0 %v281
      %v295 = vpop.f32.mrf.mxu0
      %v296 = vadd.f32 0.0, %v295
      %v297 = vpop.f32.mrf.mxu0
      %v298 = vadd.f32 0.0, %v297
      %299 = vdwg.mxu0
      %v300 = vsel %vm159, %v296, -inf
      %301 = vmax.xlane.f32.xlu0 %v300
      %v302 = vpop.xlane.xlu0 %301
      %v303 = vsel %vm163, %v298, -inf
      %304 = vmax.xlane.f32.xlu0 %v303
      %v305 = vpop.xlane.xlu0 %304
      %v306 = vsub.f32 %v296, %v302
      %v307 = vsub.f32 %v298, %v305
      %v308 = vmul.f32 %v306, 1.442695
      %v309 = vpow.pop %v308
      %v310 = vmul.f32 %v307, 1.442695
      %v311 = vpow.pop %v310
      %v312 = vsel %vm159, %v309, 0.0
      %313 = vadd.xlane.f32.xlu0 %v312
      %v314 = vpop.xlane.xlu0 %313
      %v315 = vsel %vm163, %v311, 0.0
      %316 = vadd.xlane.f32.xlu0 %v315
      %v317 = vpop.xlane.xlu0 %316
      %v318 = vrcp.pop %v314
      %v319 = vrcp.pop %v317
      %v320 = vmul.f32 %v309, %v318
      %v321 = vmul.f32 %v311, %v319
      %v322 = vpack.c.bf16 %v321, %v320
      %323 = vrot.lane.b32.xlu0 %v135, 48
      %v324 = vpop.permute.xlu0 %323
      %v326 = vsel %vm159, %v322, 0
      %v329 = vsel %vm189, %v324, 0
      %331 = vmatpush.bf16.msra.mxu0 0
      %332 = vmatpush.bf16.msra.mxu0 0
      %333 = vmatpush.bf16.msra.mxu0 0
      %334 = vmatpush.bf16.msra.mxu0 0
      %335 = vmatpush.bf16.msra.mxu0 0
      %336 = vmatpush.bf16.msra.mxu0 0
      %337 = vmatpush.bf16.msra.mxu0 0
      %338 = vmatpush.bf16.msra.mxu0 %v329
      %339 = vmatmul.bf16.gmra.mxu0 %v326
      %v340 = vpop.f32.mrf.mxu0
      %v341 = vadd.f32 0.0, %v340
      %v342 = vpop.f32.mrf.mxu0
      %v343 = vadd.f32 0.0, %v342
      %344 = vdwg.mxu0
      %345 = vrot.lane.b32.xlu0 %v130, 104
      %v346 = vpop.permute.xlu0 %345
      %347 = vrot.lane.b32.xlu0 %v135, 72
      %v348 = vpop.permute.xlu0 %347
      %v350 = vsel %vm138, %v346, 0
      %v353 = vsel %vm138, %v348, 0
      %355 = vmatpush.bf16.xpose.msra.mxu0 0
      %356 = vmatpush.bf16.xpose.msra.mxu0 0
      %357 = vmatpush.bf16.xpose.msra.mxu0 0
      %358 = vmatpush.bf16.xpose.msra.mxu0 0
      %359 = vmatpush.bf16.xpose.msra.mxu0 0
      %360 = vmatpush.bf16.xpose.msra.mxu0 0
      %361 = vmatpush.bf16.xpose.msra.mxu0 0
      %362 = vmatpush.bf16.xpose.msra.mxu0 %v353
      %363 = vmatmul.bf16.gmra.mxu0 %v350
      %v364 = vpop.f32.mrf.mxu0
      %v365 = vadd.f32 0.0, %v364
      %v366 = vpop.f32.mrf.mxu0
      %v367 = vadd.f32 0.0, %v366
      %368 = vdwg.mxu0
      %v369 = vsel %vm159, %v365, -inf
      %370 = vmax.xlane.f32.xlu0 %v369
      %v371 = vpop.xlane.xlu0 %370
      %v372 = vsel %vm163, %v367, -inf
      %373 = vmax.xlane.f32.xlu0 %v372
      %v374 = vpop.xlane.xlu0 %373
      %v375 = vsub.f32 %v365, %v371
      %v376 = vsub.f32 %v367, %v374
      %v377 = vmul.f32 %v375, 1.442695
      %v378 = vpow.pop %v377
      %v379 = vmul.f32 %v376, 1.442695
      %v380 = vpow.pop %v379
      %v381 = vsel %vm159, %v378, 0.0
      %382 = vadd.xlane.f32.xlu0 %v381
      %v383 = vpop.xlane.xlu0 %382
      %v384 = vsel %vm163, %v380, 0.0
      %385 = vadd.xlane.f32.xlu0 %v384
      %v386 = vpop.xlane.xlu0 %385
      %v387 = vrcp.pop %v383
      %v388 = vrcp.pop %v386
      %v389 = vmul.f32 %v378, %v387
      %v390 = vmul.f32 %v380, %v388
      %v391 = vpack.c.bf16 %v390, %v389
      %392 = vrot.lane.b32.xlu0 %v135, 40
      %v393 = vpop.permute.xlu0 %392
      %v395 = vsel %vm159, %v391, 0
      %v398 = vsel %vm189, %v393, 0
      %400 = vmatpush.bf16.msra.mxu0 0
      %401 = vmatpush.bf16.msra.mxu0 0
      %402 = vmatpush.bf16.msra.mxu0 0
      %403 = vmatpush.bf16.msra.mxu0 0
      %404 = vmatpush.bf16.msra.mxu0 0
      %405 = vmatpush.bf16.msra.mxu0 0
      %406 = vmatpush.bf16.msra.mxu0 0
      %407 = vmatpush.bf16.msra.mxu0 %v398
      %408 = vmatmul.bf16.gmra.mxu0 %v395
      %v409 = vpop.f32.mrf.mxu0
      %v410 = vadd.f32 0.0, %v409
      %v411 = vpop.f32.mrf.mxu0
      %v412 = vadd.f32 0.0, %v411
      %413 = vdwg.mxu0
      %416 = vrot.lane.b32.xlu0 %v272, 8
      %v417 = vpop.permute.xlu0 %416
      %418 = vrot.lane.b32.xlu0 %v274, 8
      %v419 = vpop.permute.xlu0 %418
      %424 = vrot.lane.b32.xlu0 %v341, 16
      %v425 = vpop.permute.xlu0 %424
      %426 = vrot.lane.b32.xlu0 %v343, 16
      %v427 = vpop.permute.xlu0 %426
      %432 = vrot.lane.b32.xlu0 %v410, 24
      %v433 = vpop.permute.xlu0 %432
      %434 = vrot.lane.b32.xlu0 %v412, 24
      %v435 = vpop.permute.xlu0 %434
      %v438 = vsel %vm138, %v203, %v417
      %v439 = vsel %vm138, %v205, %v419
      %vm440 = vcmask 130048
      %v441 = vsel %vm440, %v438, %v425
      %v442 = vsel %vm440, %v439, %v427
      %vm443 = vcmask 195584
      %v444 = vsel %vm443, %v441, %v433
      %v445 = vsel %vm443, %v442, %v435
      %v446 = vpack.c.bf16 %v444, %v444
      %v447 = vpack.c.bf16 %v445, %v445
      %vm448 = vcmask 257024
      %449 = vst.msk [vmem:[%s116] sm:$0xf] %vm448, %v446
      %vm450 = vcmask 254976
      %451 = vst.msk [vmem:[%s116 + $0x4] sm:$0x3] %vm450, %v447
      %p452 = scmp.lt.s32.totalorder %s12, 1
      %s453 = scalar_select %p452, %s12, 1
      %s454 = smul.addr %s453, 2
      %s455 = smul.addr %s454, 4
      %s456 = scalar_lea.vmem %s1, %s455
      // Predicated region
      $region25: #{_lambda_.12} parent=23 // pred_check
        %p457 = pneg %p56
      $region26: #{_lambda_.12} parent=23 // pred_check_branch
        %459 = sbr.rel (%p457) target = $region28
      $region27: #{_lambda_.12} parent=23 // pred_region
        _
      $region28: #{_lambda_.12} parent=23 // pred_fallthru
        _
    $region24: #{_lambda_.12} parent=5 // pred_fallthru
      _
    %p460 = scmp.le.s32.totalorder 2, %s7
    // Predicated region
    $region29: #{_lambda_.12} parent=5 // pred_check
      %p461 = pneg %p460
    $region30: #{_lambda_.12} parent=5 // pred_check_branch
      %463 = sbr.rel (%p461) target = $region32
    $region31: #{_lambda_.12} parent=5 // pred_region
      %s464 = ssub.s32 %s7, 2
      // Predicated region
      $region33: #{_lambda_.12} parent=31 // pred_check
        %p465 = pneg %p62
      $region34: #{_lambda_.12} parent=31 // pred_check_branch
        %467 = sbr.rel (%p465) target = $region36
      $region35: #{_lambda_.12} parent=31 // pred_region
        %p468 = scmp.lt.s32.totalorder %s13, 1
        %s469 = scalar_select %p468, %s13, 1
        %s470 = smul.addr %s469, 2
        %s471 = smul.addr %s470, 4
        %s472 = scalar_lea.vmem %s1, %s471
      $region36: #{_lambda_.12} parent=31 // pred_fallthru
        _
    $region32: #{_lambda_.12} parent=5 // pred_fallthru
      _
  $region6: #{_lambda_.12} parent=0 // loop_footer
    %s11 = sadd.s32 1, %s7
  $region7: #{_lambda_.12} parent=0 // loop_footer_branch
    %6 = sbr.rel target = $region3
  $region8: #{_lambda_.12} parent=0 // loop_exit
    _

// kernel: _lambda_.19
$region0: #{_lambda_.19}
  #allocation0 [shape = 'u32[]', space=smem, size = 0x4, offset = 0x4, fixed_abs, tag = 'smem constant byte address 0x4 - core index']
  #allocation1 [shape = 'u32[72,128]{1,0:T(1,128)}', space=vmem, size = 0x9000, scoped, tag = 'internal scratch']
  #allocation2 [shape = 'bf16[8,32]{1,0:T(8,128)(2,1)}', space=vmem, size = 0x800, scoped, tag = 'scratch operand']
  %s0 = inlined_call_operand.vmem [shape: bf16[8,32], index: 0, kind: input, shape index: {}]
  %s1 = inlined_call_operand.vmem [shape: f32[1,32], index: 1, kind: input, shape index: {}]
  %s2 = inlined_call_operand.vmem [shape: f32[1,32], index: 2, kind: input, shape index: {}]
  %s3 = inlined_call_operand.vmem [shape: bf16[32,768], index: 3, kind: input, shape index: {}]
  %s4 = inlined_call_operand.vmem [shape: f32[1,768], index: 4, kind: input, shape index: {}]
  %s5 = inlined_call_operand.vmem [shape: f32[8,768], index: 5, kind: output, shape index: {}]
  %s6 = sld [smem:[#allocation0]]
  $region83: #{_lambda_.19} parent=0
    _
  %s8 = ssub.s32 1, %s6
  %s9 = scalar_select 0, %s8, %s6
  $region1: #{_lambda_.19} parent=0
    #allocation3 [shape = 'u8[49152]{0}', space=vmem, size = 0xc000, scoped, tag = 'input window, operand 3']
    loop: start=0, step=1, limit=4
    $region2: #{_lambda_.19} parent=1 // loop_pre_header
      _
    $region3: #{_lambda_.19} parent=1 // loop_header
      %s11 = sphi 0, %s15
      %p12 = scmp.ge.s32.totalorder %s11, 4
      %s18 = sphi 0, %s30
      %s19 = sphi 0, %s26
      %s20 = sphi 0, %s18
      %s21 = sphi 0, %s19
      %s22 = sphi 0, %s20
      %s23 = sphi 0, %s21
      %s33 = sphi 0, %s35
      %s36 = sphi 0, %s33
      %s37 = sphi 0, %s36
      %s53 = sphi 0, %s37
      %s57 = sphi 0, %s57
      %s59 = sphi 0, %s57
      %s60 = sphi 0, %s59
      %s74 = sphi 0, %s60
      %s78 = sphi 0, %s78
      %s80 = sphi 0, %s78
      %s81 = sphi 0, %s80
      %s95 = sphi 0, %s81
      %s101 = sphi 0, %s103
      %s104 = sphi 0, %s101
      %s105 = sphi 0, %s104
      %s121 = sphi 0, %s105
      %s127 = sphi 0, %s129
      %s130 = sphi 0, %s127
      %s131 = sphi 0, %s130
      %s147 = sphi 0, %s131
      %s155 = sphi 0, %s157
      %s158 = sphi 0, %s155
      %s159 = sphi 0, %s158
      %s175 = sphi 0, %s159
    $region4: #{_lambda_.19} parent=1 // loop_header_branch
      %14 = sbr.rel (%p12) target = $region8
    $region5: #{_lambda_.19} parent=1 // loop_body
      %s16 = ssub.s32 %s11, 1
      %s17 = ssub.s32 %s11, 2
      %s24 = sadd.s32 1, %s19
      %p25 = scmp.ge.s32.totalorder %s24, 2
      %s26 = scalar_select %p25, 0, %s24
      %s27 = sadd.s32 1, %s18
      %s28 = scalar_select %p25, %s27, %s18
      %p29 = scmp.ge.s32.totalorder %s28, 1
      %s30 = scalar_select %p29, 0, %s28
      %s31 = ssub.s32 %s18, %s30
      %p32 = scmp.eq.s32.totalorder %s31, 0
      %s34 = sadd.s32 %s33, 1
      %s35 = scalar_select %p32, %s33, %s34
      %p38 = pneg %p32
      %p39 = scmp.eq.s32.totalorder %s11, 1
      %p40 = por %p38, %p39
      %p41 = scmp.ne.s32.totalorder %s33, %s36
      %p42 = scmp.eq.s32.totalorder %s11, 0
      %p43 = por %p41, %p42
      %p44 = scmp.ne.s32.totalorder %s33, %s36
      %p45 = scmp.eq.s32.totalorder %s16, 1
      %p46 = por %p44, %p45
      %p47 = scmp.ne.s32.totalorder %s36, %s37
      %p48 = scmp.eq.s32.totalorder %s16, 0
      %p49 = por %p47, %p48
      %p50 = scmp.ne.s32.totalorder %s36, %s37
      %p51 = scmp.eq.s32.totalorder %s17, 1
      %p52 = por %p50, %p51
      %p54 = scmp.ne.s32.totalorder %s37, %s53
      %p55 = scmp.eq.s32.totalorder %s17, 0
      %p56 = por %p54, %p55
      %s58 = sadd.s32 %s57, 1
      %p61 = scmp.eq.s32.totalorder %s11, 1
      %p62 = scmp.ne.s32.totalorder %s57, %s59
      %p63 = scmp.eq.s32.totalorder %s11, 0
      %p64 = por %p62, %p63
      %p65 = scmp.ne.s32.totalorder %s57, %s59
      %p66 = scmp.eq.s32.totalorder %s16, 1
      %p67 = por %p65, %p66
      %p68 = scmp.ne.s32.totalorder %s59, %s60
      %p69 = scmp.eq.s32.totalorder %s16, 0
      %p70 = por %p68, %p69
      %p71 = scmp.ne.s32.totalorder %s59, %s60
      %p72 = scmp.eq.s32.totalorder %s17, 1
      %p73 = por %p71, %p72
      %p75 = scmp.ne.s32.totalorder %s60, %s74
      %p76 = scmp.eq.s32.totalorder %s17, 0
      %p77 = por %p75, %p76
      %s79 = sadd.s32 %s78, 1
      %p82 = scmp.eq.s32.totalorder %s11, 1
      %p83 = scmp.ne.s32.totalorder %s78, %s80
      %p84 = scmp.eq.s32.totalorder %s11, 0
      %p85 = por %p83, %p84
      %p86 = scmp.ne.s32.totalorder %s78, %s80
      %p87 = scmp.eq.s32.totalorder %s16, 1
      %p88 = por %p86, %p87
      %p89 = scmp.ne.s32.totalorder %s80, %s81
      %p90 = scmp.eq.s32.totalorder %s16, 0
      %p91 = por %p89, %p90
      %p92 = scmp.ne.s32.totalorder %s80, %s81
      %p93 = scmp.eq.s32.totalorder %s17, 1
      %p94 = por %p92, %p93
      %p96 = scmp.ne.s32.totalorder %s81, %s95
      %p97 = scmp.eq.s32.totalorder %s17, 0
      %p98 = por %p96, %p97
      %s99 = ssub.s32 %s19, %s26
      %p100 = scmp.eq.s32.totalorder %s99, 0
      %s102 = sadd.s32 %s101, 1
      %s103 = scalar_select %p100, %s101, %s102
      %p106 = pneg %p100
      %p107 = scmp.eq.s32.totalorder %s11, 1
      %p108 = por %p106, %p107
      %p109 = scmp.ne.s32.totalorder %s101, %s104
      %p110 = scmp.eq.s32.totalorder %s11, 0
      %p111 = por %p109, %p110
      %p112 = scmp.ne.s32.totalorder %s101, %s104
      %p113 = scmp.eq.s32.totalorder %s16, 1
      %p114 = por %p112, %p113
      %p115 = scmp.ne.s32.totalorder %s104, %s105
      %p116 = scmp.eq.s32.totalorder %s16, 0
      %p117 = por %p115, %p116
      %p118 = scmp.ne.s32.totalorder %s104, %s105
      %p119 = scmp.eq.s32.totalorder %s17, 1
      %p120 = por %p118, %p119
      %p122 = scmp.ne.s32.totalorder %s105, %s121
      %p123 = scmp.eq.s32.totalorder %s17, 0
      %p124 = por %p122, %p123
      %s125 = ssub.s32 %s19, %s26
      %p126 = scmp.eq.s32.totalorder %s125, 0
      %s128 = sadd.s32 %s127, 1
      %s129 = scalar_select %p126, %s127, %s128
      %p132 = pneg %p126
      %p133 = scmp.eq.s32.totalorder %s11, 1
      %p134 = por %p132, %p133
      %p135 = scmp.ne.s32.totalorder %s127, %s130
      %p136 = scmp.eq.s32.totalorder %s11, 0
      %p137 = por %p135, %p136
      %p138 = scmp.ne.s32.totalorder %s127, %s130
      %p139 = scmp.eq.s32.totalorder %s16, 1
      %p140 = por %p138, %p139
      %p141 = scmp.ne.s32.totalorder %s130, %s131
      %p142 = scmp.eq.s32.totalorder %s16, 0
      %p143 = por %p141, %p142
      %p144 = scmp.ne.s32.totalorder %s130, %s131
      %p145 = scmp.eq.s32.totalorder %s17, 1
      %p146 = por %p144, %p145
      %p148 = scmp.ne.s32.totalorder %s131, %s147
      %p149 = scmp.eq.s32.totalorder %s17, 0
      %p150 = por %p148, %p149
      %s151 = ssub.s32 %s18, %s30
      %s152 = ssub.s32 %s19, %s26
      %s153 = sor.u32 %s151, %s152
      %p154 = scmp.eq.s32.totalorder %s153, 0
      %s156 = sadd.s32 %s155, 1
      %s157 = scalar_select %p154, %s155, %s156
      %p160 = pneg %p154
      %p161 = scmp.eq.s32.totalorder %s11, 1
      %p162 = por %p160, %p161
      %p163 = scmp.ne.s32.totalorder %s155, %s158
      %p164 = scmp.eq.s32.totalorder %s11, 0
      %p165 = por %p163, %p164
      %p166 = scmp.ne.s32.totalorder %s155, %s158
      %p167 = scmp.eq.s32.totalorder %s16, 1
      %p168 = por %p166, %p167
      %p169 = scmp.ne.s32.totalorder %s158, %s159
      %p170 = scmp.eq.s32.totalorder %s16, 0
      %p171 = por %p169, %p170
      %p172 = scmp.ne.s32.totalorder %s158, %s159
      %p173 = scmp.eq.s32.totalorder %s17, 1
      %p174 = por %p172, %p173
      %p176 = scmp.ne.s32.totalorder %s159, %s175
      %p177 = scmp.eq.s32.totalorder %s17, 0
      %p178 = por %p176, %p177
      %p179 = scmp.le.s32.totalorder 1, %s11
      %p180 = scmp.lt.s32.totalorder %s11, 3
      %p181 = pnand %p179, %p180
      %p182 = pneg %p181
      // Predicated region
      $region9: #{_lambda_.19} parent=5 // pred_check
        _
      $region10: #{_lambda_.19} parent=5 // pred_check_branch
        %184 = sbr.rel (%p181) target = $region12
      $region11: #{_lambda_.19} parent=5 // pred_region
        %s185 = ssub.s32 %s11, 1
        // Predicated region
        $region13: #{_lambda_.19} parent=11 // pred_check
          %p186 = pneg %p49
        $region14: #{_lambda_.19} parent=11 // pred_check_branch
          %188 = sbr.rel (%p186) target = $region16
        $region15: #{_lambda_.19} parent=11 // pred_region
          %p189 = scmp.lt.s32.totalorder %s20, 0
          %s190 = scalar_select %p189, %s20, 0
          %s191 = smul.addr %s190, 4
          %s192 = scalar_lea.vmem %s0, %s191
        $region16: #{_lambda_.19} parent=11 // pred_fallthru
          _
        // Predicated region
        $region17: #{_lambda_.19} parent=11 // pred_check
          %p193 = pneg %p70
        $region18: #{_lambda_.19} parent=11 // pred_check_branch
          %195 = sbr.rel (%p193) target = $region20
        $region19: #{_lambda_.19} parent=11 // pred_region
          _
        $region20: #{_lambda_.19} parent=11 // pred_fallthru
          _
        // Predicated region
        $region21: #{_lambda_.19} parent=11 // pred_check
          %p196 = pneg %p91
        $region22: #{_lambda_.19} parent=11 // pred_check_branch
          %198 = sbr.rel (%p196) target = $region24
        $region23: #{_lambda_.19} parent=11 // pred_region
          _
        $region24: #{_lambda_.19} parent=11 // pred_fallthru
          _
      $region12: #{_lambda_.19} parent=5 // pred_fallthru
        _
      %p199 = scmp.lt.s32.totalorder %s11, 2
      // Predicated region
      $region25: #{_lambda_.19} parent=5 // pred_check
        %p200 = pneg %p199
      $region26: #{_lambda_.19} parent=5 // pred_check_branch
        %202 = sbr.rel (%p200) target = $region28
      $region27: #{_lambda_.19} parent=5 // pred_region
        // Predicated region
        $region29: #{_lambda_.19} parent=27 // pred_check
          %p203 = pneg %p111
        $region30: #{_lambda_.19} parent=27 // pred_check_branch
          %205 = sbr.rel (%p203) target = $region32
        $region31: #{_lambda_.19} parent=27 // pred_region
          %s206 = sand.u32 %s101, 1
          %s207 = sand.u32 %s101, 1
          %s208 = smul.addr %s207, 48
          %s209 = scalar_lea.vmem [#allocation3], %s208
          %s210 = smul.u32 3, %s19
          %s211 = smul.addr %s210, 4
          %s212 = scalar_lea.vmem %s3, %s211
          // Predicated region
          $region33: #{_lambda_.19} parent=31 // pred_check
            _
          $region34: #{_lambda_.19} parent=31 // pred_check_branch
            %214 = sbr.rel (0) target = $region36
          $region35: #{_lambda_.19} parent=31 // pred_region
            // Predicated region
            $region37: #{_lambda_.19} parent=35 // pred_check
              _
            $region38: #{_lambda_.19} parent=35 // pred_check_branch
              %216 = sbr.rel (0) target = $region40
            $region39: #{_lambda_.19} parent=35 // pred_region
              %s217 = scalar_lea.vmem %s212, 8
              %s218 = scalar_lea.vmem %s209, 8 [#allocation3]
              loop: start=0, step=1, limit=1
              $region41: #{_lambda_.19} parent=39 // loop_pre_header
                _
              $region42: #{_lambda_.19} parent=39 // loop_header
                %s220 = sphi 0, %s224
                %p221 = scmp.ge.s32.totalorder %s220, 1
                %s225 = sphi %s212, %s212
                %s226 = sphi %s209, %s209
              $region43: #{_lambda_.19} parent=39 // loop_header_branch
                %223 = sbr.rel (%p221) target = $region47
              $region44: #{_lambda_.19} parent=39 // loop_body
                %v227 = vld [vmem:[%s225] sm:$0xff]
                %228 = vst [vmem:[%s226] sm:$0xff] %v227
                %v229 = vld [vmem:[%s225 + $0x18] sm:$0xff]
                %230 = vst [vmem:[%s226 + $0xc] sm:$0xff] %v229
                %v231 = vld [vmem:[%s225 + $0x30] sm:$0xff]
                %232 = vst [vmem:[%s226 + $0x18] sm:$0xff] %v231
                %v233 = vld [vmem:[%s225 + $0x48] sm:$0xff]
                %234 = vst [vmem:[%s226 + $0x24] sm:$0xff] %v233
              $region45: #{_lambda_.19} parent=39 // loop_footer
                %s224 = sadd.s32 1, %s220
              $region46: #{_lambda_.19} parent=39 // loop_footer_branch
                %219 = sbr.rel target = $region42
              $region47: #{_lambda_.19} parent=39 // loop_exit
                _
              %s236 = ssub.s32 16, 1
              loop: start=0, step=1, limit=1
              $region48: #{_lambda_.19} parent=39 // loop_pre_header
                _
              $region49: #{_lambda_.19} parent=39 // loop_header
                %s238 = sphi 0, %s242
                %p239 = scmp.ge.s32.totalorder %s238, 1
                %s243 = sphi %s217, %s217
                %s244 = sphi %s218, %s218
              $region50: #{_lambda_.19} parent=39 // loop_header_branch
                %241 = sbr.rel (%p239) target = $region54
              $region51: #{_lambda_.19} parent=39 // loop_body
                %v245 = vld [vmem:[%s243] sm:%s236]
                %246 = vst [vmem:[%s244] sm:%s236] %v245
                %v247 = vld [vmem:[%s243 + $0x18] sm:%s236]
                %248 = vst [vmem:[%s244 + $0xc] sm:%s236] %v247
                %v249 = vld [vmem:[%s243 + $0x30] sm:%s236]
                %250 = vst [vmem:[%s244 + $0x18] sm:%s236] %v249
                %v251 = vld [vmem:[%s243 + $0x48] sm:%s236]
                %252 = vst [vmem:[%s244 + $0x24] sm:%s236] %v251
              $region52: #{_lambda_.19} parent=39 // loop_footer
                %s242 = sadd.s32 1, %s238
              $region53: #{_lambda_.19} parent=39 // loop_footer_branch
                %237 = sbr.rel target = $region49
              $region54: #{_lambda_.19} parent=39 // loop_exit
                _
            $region40: #{_lambda_.19} parent=35 // pred_fallthru
              _
          $region36: #{_lambda_.19} parent=31 // pred_fallthru
            _
          %253 = vnop
        $region32: #{_lambda_.19} parent=27 // pred_fallthru
          _
        // Predicated region
        $region55: #{_lambda_.19} parent=27 // pred_check
          %p254 = pneg %p137
        $region56: #{_lambda_.19} parent=27 // pred_check_branch
          %256 = sbr.rel (%p254) target = $region58
        $region57: #{_lambda_.19} parent=27 // pred_region
          %s257 = smul.u32 3, %s19
          %p258 = scmp.lt.s32.totalorder %s257, 5
          %s259 = scalar_select %p258, %s257, 5
          %s260 = scalar_lea.vmem %s4, %s259
          %s261 = smul.u32 3, %s19
        $region58: #{_lambda_.19} parent=27 // pred_fallthru
          _
      $region28: #{_lambda_.19} parent=5 // pred_fallthru
        _
      %p262 = scmp.le.s32.totalorder 1, %s11
      %p263 = scmp.lt.s32.totalorder %s11, 3
      %p264 = pnand %p262, %p263
      %p265 = pneg %p264
      // Predicated region
      $region59: #{_lambda_.19} parent=5 // pred_check
        _
      $region60: #{_lambda_.19} parent=5 // pred_check_branch
        %267 = sbr.rel (%p264) target = $region62
      $region61: #{_lambda_.19} parent=5 // pred_region
        %s268 = ssub.s32 %s11, 1
        %s269 = sand.u32 %s104, 1
        %s270 = sand.u32 %s104, 1
        %s271 = smul.addr %s270, 48
        %s272 = scalar_lea.vmem [#allocation3], %s271
        // Predicated region
        $region63: #{_lambda_.19} parent=61 // pred_check
          %p273 = pneg %p117
        $region64: #{_lambda_.19} parent=61 // pred_check_branch
          %275 = sbr.rel (%p273) target = $region66
        $region65: #{_lambda_.19} parent=61 // pred_region
          _
        $region66: #{_lambda_.19} parent=61 // pred_fallthru
          _
        %p276 = scmp.lt.s32.totalorder %s20, 0
        %s277 = scalar_select %p276, %s20, 0
        %s278 = smul.addr %s277, 4
        %s279 = scalar_lea.vmem %s0, %s278
        %p280 = pneg %p49
        %p281 = pneg %p46
        %p282 = pneg %p70
        %p283 = pneg %p67
        %p284 = pneg %p91
        %p285 = pneg %p88
        %s286 = sand.u32 %s104, 1
        %s287 = sand.u32 %s104, 1
        %s288 = smul.addr %s287, 48
        %s289 = scalar_lea.vmem [#allocation3], %s288
        %p290 = pneg %p117
        %p291 = pneg %p114
        %s292 = smul.u32 3, %s21
        %p293 = scmp.lt.s32.totalorder %s292, 5
        %s294 = scalar_select %p293, %s292, 5
        %s295 = scalar_lea.vmem %s4, %s294
        %p296 = pneg %p143
        %p297 = pneg %p140
        %p298 = pneg %p171
        %p299 = pneg %p168
        %s300 = smul.u32 3, %s21
        %p301 = scmp.lt.s32.totalorder %s20, 0
        %s302 = scalar_select %p301, %s20, 0
        %p303 = scmp.lt.s32.totalorder %s300, 5
        %s304 = scalar_select %p303, %s300, 5
        %s305 = smul.addr %s302, 6
        %s306 = sadd.s32 %s304, %s305
        %s307 = smul.addr %s306, 8
        %s308 = scalar_lea.vmem %s5, %s307
        %p309 = scmp.lt.s32.totalorder %s20, 0
        %s310 = scalar_select %p309, %s20, 0
        %s311 = smul.addr %s310, 4
        %s312 = scalar_lea.vmem %s0, %s311
        %s313 = smul.u32 3, %s21
        %s314 = smul.u32 3, %s21
        %p315 = scmp.lt.s32.totalorder %s314, 5
        %s316 = scalar_select %p315, %s314, 5
        %s317 = scalar_lea.vmem %s4, %s316
        %s318 = smul.u32 3, %s21
        %s319 = smul.u32 3, %s21
        %p320 = scmp.lt.s32.totalorder %s20, 0
        %s321 = scalar_select %p320, %s20, 0
        %p322 = scmp.lt.s32.totalorder %s319, 5
        %s323 = scalar_select %p322, %s319, 5
        %s324 = smul.addr %s321, 6
        %s325 = sadd.s32 %s323, %s324
        %s326 = smul.addr %s325, 8
        %s327 = scalar_lea.vmem %s5, %s326
        %s328 = smul.u32 3, %s21
        %p330 = scmp.eq.s32.totalorder %s21, 0
        // Predicated region
        $region67: #{_lambda_.19} parent=61 // pred_check
          %p331 = pneg %p330
        $region68: #{_lambda_.19} parent=61 // pred_check_branch
          %333 = sbr.rel (%p331) target = $region70
        $region69: #{_lambda_.19} parent=61 // pred_region
          %v334 = vld [vmem:[%s312] sm:$0xf]
          %v335 = vunpack.c.l.bf16 %v334
          %vm336 = vcmask 261120
          %v337 = vsel %vm336, %v335, 0.0
          %338 = vadd.xlane.f32.xlu0 %v337
          %v339 = vpop.xlane.xlu0 %338
          %v340 = vrcp.pop 32.0
          %v341 = vmul.f32 32.0, %v340
          %v342 = vsub.f32 1.0, %v341
          %v343 = vmul.f32 %v340, %v342
          %v344 = vadd.f32 %v340, %v343
          %vm345 = vweird.f32 %v340
          %v346 = vsel %vm345, %v340, %v344
          %v347 = vmul.f32 %v339, %v346
          %v348 = vsub.f32 %v335, %v347
          %v349 = vmul.f32 %v348, %v348
          %v350 = vsel %vm336, %v349, 0.0
          %351 = vadd.xlane.f32.xlu0 %v350
          %v352 = vpop.xlane.xlu0 %351
          %v353 = vmul.f32 %v352, %v346
          %v354 = vadd.f32 %v353, 1e-05
          %v355 = vrsqrt.pop %v354
          %v356 = vmul.f32 %v355, %v354
          %v357 = vmul.f32 %v356, %v355
          %v358 = vmul.f32 0.5, %v357
          %v359 = vsub.f32 1.5, %v358
          %v360 = vmul.f32 %v355, %v359
          %vm361 = vweird.f32 %v354
          %vm362 = vweird.f32 %v355
          %vm363 = vmor %vm361, %vm362
          %v364 = vsel %vm363, %v355, %v360
          %v365 = vmul.f32 %v348, %v364
          %v366 = vld [vmem:[%s1] sm:$0x1]
          %v368 = vperm.slane %v366, 0
          %v370 = vmul.f32 %v365, %v368
          %v371 = vld [vmem:[%s2] sm:$0x1]
          %v373 = vperm.slane %v371, 0
          %v375 = vadd.f32 %v370, %v373
          %v376 = vpack.c.bf16 %v375, %v375
          %vm377 = vcmask 257024
          %378 = vst.msk [vmem:[#allocation2] sm:$0xf] %vm377, %v376
        $region70: #{_lambda_.19} parent=61 // pred_fallthru
          _
        %v379 = vld [vmem:[#allocation2] sm:$0xf]
        %v380 = vld [vmem:[%s272] sm:$0xff]
        %v381 = vld [vmem:[%s272 + $0x8] sm:$0xf]
        %v382 = vld [vmem:[%s272 + $0xc] sm:$0xff]
        %v383 = vld [vmem:[%s272 + $0x14] sm:$0xf]
        %v384 = vld [vmem:[%s272 + $0x18] sm:$0xff]
        %v385 = vld [vmem:[%s272 + $0x20] sm:$0xf]
        %v386 = vld [vmem:[%s272 + $0x24] sm:$0xff]
        %v387 = vld [vmem:[%s272 + $0x2c] sm:$0xf]
        %v388 = vld [vmem:[%s317] sm:$0x7]
        %v390 = vperm.slane %v388, 0
        %v391 = vperm.slane %v388, 1
        %v392 = vperm.slane %v388, 2
        %v404 = vunpack.c.l.b16 %v380
        %v405 = vunpack.c.h.b16 %v380
        %v406 = vunpack.c.l.b16 %v381
        %v407 = vunpack.c.l.b16 %v382
        %v408 = vunpack.c.h.b16 %v382
        %v409 = vunpack.c.l.b16 %v383
        %v410 = vunpack.c.l.b16 %v384
        %v411 = vunpack.c.h.b16 %v384
        %v412 = vunpack.c.l.b16 %v385
        %v413 = vunpack.c.l.b16 %v386
        %v414 = vunpack.c.h.b16 %v386
        %v415 = vunpack.c.l.b16 %v387
        %v416 = vpack.c.b16 %v407, %v404
        %v417 = vpack.c.b16 %v408, %v405
        %v418 = vpack.c.b16 %v409, %v406
        %v419 = vpack.c.b16 %v413, %v410
        %v420 = vpack.c.b16 %v414, %v411
        %v421 = vpack.c.b16 %v415, %v412
        %vm428 = vcmask 261120
        %v430 = vsel %vm428, %v379, 0
        %432 = vmatpush.bf16.msra.mxu0 0
        %433 = vmatpush.bf16.msra.mxu0 0
        %434 = vmatpush.bf16.msra.mxu0 0
        %435 = vmatpush.bf16.msra.mxu0 0
        %436 = vmatpush.bf16.msra.mxu0 0
        %437 = vmatpush.bf16.msra.mxu0 0
        %438 = vmatpush.bf16.msra.mxu0 %v419
        %439 = vmatpush.bf16.msra.mxu0 %v416
        %440 = vmatmul.bf16.gmra.mxu0 %v430
        %v441 = vpop.f32.mrf.mxu0
        %v442 = vadd.f32 %v390, %v441
        %v443 = vpop.f32.mrf.mxu0
        %444 = vdwg.mxu0
        %445 = vmatpush.bf16.msra.mxu0 0
        %446 = vmatpush.bf16.msra.mxu0 0
        %447 = vmatpush.bf16.msra.mxu0 0
        %448 = vmatpush.bf16.msra.mxu0 0
        %449 = vmatpush.bf16.msra.mxu0 0
        %450 = vmatpush.bf16.msra.mxu0 0
        %451 = vmatpush.bf16.msra.mxu0 %v420
        %452 = vmatpush.bf16.msra.mxu0 %v417
        %453 = vmatmul.bf16.gmra.mxu0 %v430
        %v454 = vpop.f32.mrf.mxu0
        %v455 = vadd.f32 %v391, %v454
        %v456 = vpop.f32.mrf.mxu0
        %457 = vdwg.mxu0
        %458 = vmatpush.bf16.msra.mxu0 0
        %459 = vmatpush.bf16.msra.mxu0 0
        %460 = vmatpush.bf16.msra.mxu0 0
        %461 = vmatpush.bf16.msra.mxu0 0
        %462 = vmatpush.bf16.msra.mxu0 0
        %463 = vmatpush.bf16.msra.mxu0 0
        %464 = vmatpush.bf16.msra.mxu0 %v421
        %465 = vmatpush.bf16.msra.mxu0 %v418
        %466 = vmatmul.bf16.gmra.mxu0 %v430
        %v467 = vpop.f32.mrf.mxu0
        %v468 = vadd.f32 %v392, %v467
        %v469 = vpop.f32.mrf.mxu0
        %470 = vdwg.mxu0
        %471 = vst [vmem:[%s327] sm:$0xff] %v442
        %472 = vst [vmem:[%s327 + $0x8] sm:$0xff] %v455
        %473 = vst [vmem:[%s327 + $0x10] sm:$0xff] %v468
        %s474 = smul.u32 3, %s21
        %p475 = scmp.lt.s32.totalorder %s20, 0
        %s476 = scalar_select %p475, %s20, 0
        %p477 = scmp.lt.s32.totalorder %s474, 5
        %s478 = scalar_select %p477, %s474, 5
        %s479 = smul.addr %s476, 6
        %s480 = sadd.s32 %s478, %s479
        %s481 = smul.addr %s480, 8
        %s482 = scalar_lea.vmem %s5, %s481
        // Predicated region
        $region71: #{_lambda_.19} parent=61 // pred_check
          %p483 = pneg %p168
        $region72: #{_lambda_.19} parent=61 // pred_check_branch
          %485 = sbr.rel (%p483) target = $region74
        $region73: #{_lambda_.19} parent=61 // pred_region
          %s486 = smul.u32 3, %s21
        $region74: #{_lambda_.19} parent=61 // pred_fallthru
          _
      $region62: #{_lambda_.19} parent=5 // pred_fallthru
        _
      %p487 = scmp.le.s32.totalorder 2, %s11
      // Predicated region
      $region75: #{_lambda_.19} parent=5 // pred_check
        %p488 = pneg %p487
      $region76: #{_lambda_.19} parent=5 // pred_check_branch
        %490 = sbr.rel (%p488) target = $region78
      $region77: #{_lambda_.19} parent=5 // pred_region
        %s491 = ssub.s32 %s11, 2
        // Predicated region
        $region79: #{_lambda_.19} parent=77 // pred_check
          %p492 = pneg %p174
        $region80: #{_lambda_.19} parent=77 // pred_check_branch
          %494 = sbr.rel (%p492) target = $region82
        $region81: #{_lambda_.19} parent=77 // pred_region
          %s495 = smul.u32 3, %s23
          %p496 = scmp.lt.s32.totalorder %s22, 0
          %s497 = scalar_select %p496, %s22, 0
          %p498 = scmp.lt.s32.totalorder %s495, 5
          %s499 = scalar_select %p498, %s495, 5
          %s500 = smul.addr %s497, 6
          %s501 = sadd.s32 %s499, %s500
          %s502 = smul.addr %s501, 8
          %s503 = scalar_lea.vmem %s5, %s502
        $region82: #{_lambda_.19} parent=77 // pred_fallthru
          _
      $region78: #{_lambda_.19} parent=5 // pred_fallthru
        _
    $region6: #{_lambda_.19} parent=1 // loop_footer
      %s15 = sadd.s32 1, %s11
    $region7: #{_lambda_.19} parent=1 // loop_footer_branch
      %10 = sbr.rel target = $region3
    $region8: #{_lambda_.19} parent=1 // loop_exit
      _

// kernel: _lambda_.14
$region0: #{_lambda_.14}
  #allocation0 [shape = 'u32[]', space=smem, size = 0x4, offset = 0x4, fixed_abs, tag = 'smem constant byte address 0x4 - core index']
  #allocation1 [shape = 'u32[72,128]{1,0:T(1,128)}', space=vmem, size = 0x9000, scoped, tag = 'internal scratch']
  #allocation2 [shape = 'bf16[24,32]{1,0:T(8,128)(2,1)}', space=vmem, size = 0x1800, scoped, tag = 'scratch operand']
  #allocation3 [shape = 'f32[24,32]{1,0:T(8,128)}', space=vmem, size = 0x3000, scoped, tag = 'scratch operand']
  %s0 = inlined_call_operand.vmem [shape: bf16[24,32], index: 0, kind: input, shape index: {}]
  %s1 = inlined_call_operand.vmem [shape: f32[1,32], index: 1, kind: input, shape index: {}]
  %s2 = inlined_call_operand.vmem [shape: f32[1,32], index: 2, kind: input, shape index: {}]
  %s3 = inlined_call_operand.vmem [shape: bf16[32,128], index: 3, kind: input, shape index: {}]
  %s4 = inlined_call_operand.vmem [shape: f32[1,128], index: 4, kind: input, shape index: {}]
  %s5 = inlined_call_operand.vmem [shape: bf16[128,32], index: 5, kind: input, shape index: {}]
  %s6 = inlined_call_operand.vmem [shape: f32[1,32], index: 6, kind: input, shape index: {}]
  %s7 = inlined_call_operand.vmem [shape: bf16[24,32], index: 7, kind: output, shape index: {}]
  %s8 = sld [smem:[#allocation0]]
  $region46: #{_lambda_.14} parent=0
    _
  %s10 = ssub.s32 1, %s8
  %s11 = scalar_select 0, %s10, %s8
  // Predicated region
  $region2: #{_lambda_.14} parent=0 // pred_check
    _
  $region3: #{_lambda_.14} parent=0 // pred_check_branch
    %13 = sbr.rel (0) target = $region5
  $region4: #{_lambda_.14} parent=0 // pred_region
    _
  $region5: #{_lambda_.14} parent=0 // pred_fallthru
    _
  // Predicated region
  $region6: #{_lambda_.14} parent=0 // pred_check
    _
  $region7: #{_lambda_.14} parent=0 // pred_check_branch
    %15 = sbr.rel (0) target = $region9
  $region8: #{_lambda_.14} parent=0 // pred_region
    _
  $region9: #{_lambda_.14} parent=0 // pred_fallthru
    _
  // Predicated region
  $region10: #{_lambda_.14} parent=0 // pred_check
    _
  $region11: #{_lambda_.14} parent=0 // pred_check_branch
    %17 = sbr.rel (0) target = $region13
  $region12: #{_lambda_.14} parent=0 // pred_region
    _
  $region13: #{_lambda_.14} parent=0 // pred_fallthru
    _
  // Predicated region
  $region14: #{_lambda_.14} parent=0 // pred_check
    _
  $region15: #{_lambda_.14} parent=0 // pred_check_branch
    %19 = sbr.rel (0) target = $region17
  $region16: #{_lambda_.14} parent=0 // pred_region
    _
  $region17: #{_lambda_.14} parent=0 // pred_fallthru
    _
  // Predicated region
  $region18: #{_lambda_.14} parent=0 // pred_check
    _
  $region19: #{_lambda_.14} parent=0 // pred_check_branch
    %21 = sbr.rel (0) target = $region21
  $region20: #{_lambda_.14} parent=0 // pred_region
    _
  $region21: #{_lambda_.14} parent=0 // pred_fallthru
    _
  // Predicated region
  $region22: #{_lambda_.14} parent=0 // pred_check
    _
  $region23: #{_lambda_.14} parent=0 // pred_check_branch
    %23 = sbr.rel (0) target = $region25
  $region24: #{_lambda_.14} parent=0 // pred_region
    _
  $region25: #{_lambda_.14} parent=0 // pred_fallthru
    _
  // Predicated region
  $region26: #{_lambda_.14} parent=0 // pred_check
    _
  $region27: #{_lambda_.14} parent=0 // pred_check_branch
    %25 = sbr.rel (0) target = $region29
  $region28: #{_lambda_.14} parent=0 // pred_region
    _
  $region29: #{_lambda_.14} parent=0 // pred_fallthru
    _
  %p27 = scmp.eq.s32.totalorder 0, 0
  // Predicated region
  $region30: #{_lambda_.14} parent=0 // pred_check
    %p28 = pneg %p27
  $region31: #{_lambda_.14} parent=0 // pred_check_branch
    %30 = sbr.rel (%p28) target = $region33
  $region32: #{_lambda_.14} parent=0 // pred_region
    %v31 = vld [vmem:[%s0] sm:$0xf]
    %v32 = vld [vmem:[%s0 + $0x4] sm:$0xf]
    %v33 = vld [vmem:[%s0 + $0x8] sm:$0xf]
    %v34 = vunpack.c.l.bf16 %v31
    %v35 = vunpack.c.l.bf16 %v32
    %v36 = vunpack.c.l.bf16 %v33
    %vm37 = vcmask 261120
    %v38 = vsel %vm37, %v34, 0.0
    %39 = vadd.xlane.f32.xlu0 %v38
    %v40 = vpop.xlane.xlu0 %39
    %v41 = vsel %vm37, %v35, 0.0
    %42 = vadd.xlane.f32.xlu0 %v41
    %v43 = vpop.xlane.xlu0 %42
    %v44 = vsel %vm37, %v36, 0.0
    %45 = vadd.xlane.f32.xlu0 %v44
    %v46 = vpop.xlane.xlu0 %45
    %v47 = vrcp.pop 32.0
    %v48 = vmul.f32 32.0, %v47
    %v49 = vsub.f32 1.0, %v48
    %v50 = vmul.f32 %v47, %v49
    %v51 = vadd.f32 %v47, %v50
    %vm52 = vweird.f32 %v47
    %v53 = vsel %vm52, %v47, %v51
    %v54 = vmul.f32 %v40, %v53
    %v55 = vmul.f32 %v43, %v53
    %v56 = vmul.f32 %v46, %v53
    %v57 = vsub.f32 %v34, %v54
    %v58 = vsub.f32 %v35, %v55
    %v59 = vsub.f32 %v36, %v56
    %v60 = vmul.f32 %v57, %v57
    %v61 = vmul.f32 %v58, %v58
    %v62 = vmul.f32 %v59, %v59
    %v63 = vsel %vm37, %v60, 0.0
    %64 = vadd.xlane.f32.xlu0 %v63
    %v65 = vpop.xlane.xlu0 %64
    %v66 = vsel %vm37, %v61, 0.0
    %67 = vadd.xlane.f32.xlu0 %v66
    %v68 = vpop.xlane.xlu0 %67
    %v69 = vsel %vm37, %v62, 0.0
    %70 = vadd.xlane.f32.xlu0 %v69
    %v71 = vpop.xlane.xlu0 %70
    %v72 = vmul.f32 %v65, %v53
    %v73 = vmul.f32 %v68, %v53
    %v74 = vmul.f32 %v71, %v53
    %v75 = vadd.f32 %v72, 1e-05
    %v76 = vadd.f32 %v73, 1e-05
    %v77 = vadd.f32 %v74, 1e-05
    %v78 = vrsqrt.pop %v75
    %v79 = vmul.f32 %v78, %v75
    %v80 = vmul.f32 %v79, %v78
    %v81 = vmul.f32 0.5, %v80
    %v82 = vsub.f32 1.5, %v81
    %v83 = vmul.f32 %v78, %v82
    %vm84 = vweird.f32 %v75
    %vm85 = vweird.f32 %v78
    %vm86 = vmor %vm84, %vm85
    %v87 = vsel %vm86, %v78, %v83
    %v88 = vrsqrt.pop %v76
    %v89 = vmul.f32 %v88, %v76
    %v90 = vmul.f32 %v89, %v88
    %v91 = vmul.f32 0.5, %v90
    %v92 = vsub.f32 1.5, %v91
    %v93 = vmul.f32 %v88, %v92
    %vm94 = vweird.f32 %v76
    %vm95 = vweird.f32 %v88
    %vm96 = vmor %vm94, %vm95
    %v97 = vsel %vm96, %v88, %v93
    %v98 = vrsqrt.pop %v77
    %v99 = vmul.f32 %v98, %v77
    %v100 = vmul.f32 %v99, %v98
    %v101 = vmul.f32 0.5, %v100
    %v102 = vsub.f32 1.5, %v101
    %v103 = vmul.f32 %v98, %v102
    %vm104 = vweird.f32 %v77
    %vm105 = vweird.f32 %v98
    %vm106 = vmor %vm104, %vm105
    %v107 = vsel %vm106, %v98, %v103
    %v108 = vmul.f32 %v57, %v87
    %v109 = vmul.f32 %v58, %v97
    %v110 = vmul.f32 %v59, %v107
    %v111 = vld [vmem:[%s1] sm:$0x1]
    %v113 = vperm.slane %v111, 0
    %v115 = vmul.f32 %v108, %v113
    %v116 = vmul.f32 %v109, %v113
    %v117 = vmul.f32 %v110, %v113
    %v118 = vld [vmem:[%s2] sm:$0x1]
    %v120 = vperm.slane %v118, 0
    %v122 = vadd.f32 %v115, %v120
    %v123 = vadd.f32 %v116, %v120
    %v124 = vadd.f32 %v117, %v120
    %v125 = vpack.c.bf16 %v122, %v122
    %v126 = vpack.c.bf16 %v123, %v123
    %v127 = vpack.c.bf16 %v124, %v124
    %vm128 = vcmask 257024
    %129 = vst.msk [vmem:[#allocation2] sm:$0xf] %vm128, %v125
    %130 = vst.msk [vmem:[#allocation2 + $0x4] sm:$0xf] %vm128, %v126
    %131 = vst.msk [vmem:[#allocation2 + $0x8] sm:$0xf] %vm128, %v127
    %132 = vst.msk [vmem:[#allocation3] sm:$0xff] %vm37, 0.0
    %133 = vst.msk [vmem:[#allocation3 + $0x8] sm:$0xff] %vm37, 0.0
    %134 = vst.msk [vmem:[#allocation3 + $0x10] sm:$0xff] %vm37, 0.0
  $region33: #{_lambda_.14} parent=0 // pred_fallthru
    _
  %v135 = vld [vmem:[#allocation2] sm:$0xf]
  %v136 = vld [vmem:[#allocation2 + $0x4] sm:$0xf]
  %v137 = vld [vmem:[#allocation2 + $0x8] sm:$0xf]
  %v138 = vld [vmem:[%s3] sm:$0xf]
  %v139 = vld [vmem:[%s3 + $0x4] sm:$0xf]
  %v140 = vld [vmem:[%s3 + $0x8] sm:$0xf]
  %v141 = vld [vmem:[%s3 + $0xc] sm:$0xf]
  %v142 = vld [vmem:[%s4] sm:$0x1]
  %v144 = vperm.slane %v142, 0
  %v149 = vunpack.c.l.b16 %v135
  %v150 = vunpack.c.l.b16 %v136
  %v151 = vunpack.c.l.b16 %v137
  %v152 = vpack.c.b16 %v150, %v149
  %v153 = vpack.c.b16 %v151, %v151
  %v158 = vunpack.c.l.b16 %v138
  %v159 = vunpack.c.l.b16 %v139
  %v160 = vunpack.c.l.b16 %v140
  %v161 = vunpack.c.l.b16 %v141
  %v162 = vpack.c.b16 %v159, %v158
  %v163 = vpack.c.b16 %v161, %v160
  %vm166 = vcmask 261120
  %v168 = vsel %vm166, %v152, 0
  %v171 = vsel %vm166, %v153, 0
  %173 = vmatpush.bf16.msra.mxu0 0
  %174 = vmatpush.bf16.msra.mxu0 0
  %175 = vmatpush.bf16.msra.mxu0 0
  %176 = vmatpush.bf16.msra.mxu0 0
  %177 = vmatpush.bf16.msra.mxu0 0
  %178 = vmatpush.bf16.msra.mxu0 0
  %179 = vmatpush.bf16.msra.mxu0 %v163
  %180 = vmatpush.bf16.msra.mxu0 %v162
  %181 = vmatmul.bf16.gmra.mxu0 %v168
  %v182 = vpop.f32.mrf.mxu0
  %v183 = vadd.f32 %v144, %v182
  %v184 = vpop.f32.mrf.mxu0
  %v185 = vadd.f32 %v144, %v184
  %186 = vmatmul.bf16.gmra.mxu0 %v171
  %v187 = vpop.f32.mrf.mxu0
  %v188 = vadd.f32 %v144, %v187
  %v189 = vpop.f32.mrf.mxu0
  %190 = vdwg.mxu0
  %v191 = vmul.f32 %v183, 0.5
  %v192 = vmul.f32 %v185, 0.5
  %v193 = vmul.f32 %v188, 0.5
  %v194 = vmul.f32 %v183, 0.044715
  %v195 = vmul.f32 %v185, 0.044715
  %v196 = vmul.f32 %v188, 0.044715
  %v197 = vmul.f32 %v194, %v183
  %v198 = vmul.f32 %v195, %v185
  %v199 = vmul.f32 %v196, %v188
  %v200 = vmul.f32 %v197, %v183
  %v201 = vmul.f32 %v198, %v185
  %v202 = vmul.f32 %v199, %v188
  %v203 = vadd.f32 %v183, %v200
  %v204 = vadd.f32 %v185, %v201
  %v205 = vadd.f32 %v188, %v202
  %v206 = vmul.f32 %v203, 0.7978846
  %v207 = vmul.f32 %v204, 0.7978846
  %v208 = vmul.f32 %v205, 0.7978846
  %v209 = vtanh.pop %v206
  %v210 = vtanh.pop %v207
  %v211 = vtanh.pop %v208
  %v212 = vadd.f32 %v209, 1.0
  %v213 = vadd.f32 %v210, 1.0
  %v214 = vadd.f32 %v211, 1.0
  %v215 = vmul.f32 %v191, %v212
  %v216 = vmul.f32 %v192, %v213
  %v217 = vmul.f32 %v193, %v214
  %v218 = vld [vmem:[#allocation3] sm:$0xff]
  %v219 = vld [vmem:[#allocation3 + $0x8] sm:$0xff]
  %v220 = vld [vmem:[#allocation3 + $0x10] sm:$0xff]
  %v221 = vpack.c.bf16 %v216, %v215
  %v222 = vpack.c.bf16 %v217, %v217
  %v223 = vld [vmem:[%s5] sm:$0xf]
  %v224 = vld [vmem:[%s5 + $0x4] sm:$0xf]
  %v225 = vld [vmem:[%s5 + $0x8] sm:$0xf]
  %v226 = vld [vmem:[%s5 + $0xc] sm:$0xf]
  %v227 = vld [vmem:[%s5 + $0x10] sm:$0xf]
  %v228 = vld [vmem:[%s5 + $0x14] sm:$0xf]
  %v229 = vld [vmem:[%s5 + $0x18] sm:$0xf]
  %v230 = vld [vmem:[%s5 + $0x1c] sm:$0xf]
  %v231 = vld [vmem:[%s5 + $0x20] sm:$0xf]
  %v232 = vld [vmem:[%s5 + $0x24] sm:$0xf]
  %v233 = vld [vmem:[%s5 + $0x28] sm:$0xf]
  %v234 = vld [vmem:[%s5 + $0x2c] sm:$0xf]
  %v235 = vld [vmem:[%s5 + $0x30] sm:$0xf]
  %v236 = vld [vmem:[%s5 + $0x34] sm:$0xf]
  %v237 = vld [vmem:[%s5 + $0x38] sm:$0xf]
  %v238 = vld [vmem:[%s5 + $0x3c] sm:$0xf]
  %v255 = vunpack.c.l.b16 %v223
  %v256 = vunpack.c.l.b16 %v224
  %v257 = vunpack.c.l.b16 %v225
  %v258 = vunpack.c.l.b16 %v226
  %v259 = vunpack.c.l.b16 %v227
  %v260 = vunpack.c.l.b16 %v228
  %v261 = vunpack.c.l.b16 %v229
  %v262 = vunpack.c.l.b16 %v230
  %v263 = vunpack.c.l.b16 %v231
  %v264 = vunpack.c.l.b16 %v232
  %v265 = vunpack.c.l.b16 %v233
  %v266 = vunpack.c.l.b16 %v234
  %v267 = vunpack.c.l.b16 %v235
  %v268 = vunpack.c.l.b16 %v236
  %v269 = vunpack.c.l.b16 %v237
  %v270 = vunpack.c.l.b16 %v238
  %v271 = vpack.c.b16 %v256, %v255
  %v272 = vpack.c.b16 %v258, %v257
  %v273 = vpack.c.b16 %v260, %v259
  %v274 = vpack.c.b16 %v262, %v261
  %v275 = vpack.c.b16 %v264, %v263
  %v276 = vpack.c.b16 %v266, %v265
  %v277 = vpack.c.b16 %v268, %v267
  %v278 = vpack.c.b16 %v270, %v269
  %287 = vmatpush.bf16.msra.mxu0 %v278
  %288 = vmatpush.bf16.msra.mxu0 %v277
  %289 = vmatpush.bf16.msra.mxu0 %v276
  %290 = vmatpush.bf16.msra.mxu0 %v275
  %291 = vmatpush.bf16.msra.mxu0 %v274
  %292 = vmatpush.bf16.msra.mxu0 %v273
  %293 = vmatpush.bf16.msra.mxu0 %v272
  %294 = vmatpush.bf16.msra.mxu0 %v271
  %295 = vmatmul.bf16.gmra.mxu0 %v221
  %v296 = vpop.f32.mrf.mxu0
  %v297 = vadd.f32 0.0, %v296
  %v298 = vpop.f32.mrf.mxu0
  %v299 = vadd.f32 0.0, %v298
  %300 = vmatmul.bf16.gmra.mxu0 %v222
  %v301 = vpop.f32.mrf.mxu0
  %v302 = vadd.f32 0.0, %v301
  %v303 = vpop.f32.mrf.mxu0
  %304 = vdwg.mxu0
  %v305 = vadd.f32 %v218, %v297
  %v306 = vadd.f32 %v219, %v299
  %v307 = vadd.f32 %v220, %v302
  %308 = vst.msk [vmem:[#allocation3] sm:$0xff] %vm166, %v305
  %309 = vst.msk [vmem:[#allocation3 + $0x8] sm:$0xff] %vm166, %v306
  %310 = vst.msk [vmem:[#allocation3 + $0x10] sm:$0xff] %vm166, %v307
  // Predicated region
  $region34: #{_lambda_.14} parent=0 // pred_check
    %p311 = pneg %p27
  $region35: #{_lambda_.14} parent=0 // pred_check_branch
    %313 = sbr.rel (%p311) target = $region37
  $region36: #{_lambda_.14} parent=0 // pred_region
    %v314 = vld [vmem:[#allocation3] sm:$0xff]
    %v315 = vld [vmem:[#allocation3 + $0x8] sm:$0xff]
    %v316 = vld [vmem:[#allocation3 + $0x10] sm:$0xff]
    %v317 = vld [vmem:[%s6] sm:$0x1]
    %v319 = vperm.slane %v317, 0
    %v321 = vadd.f32 %v314, %v319
    %v322 = vadd.f32 %v315, %v319
    %v323 = vadd.f32 %v316, %v319
    %v324 = vld [vmem:[%s0] sm:$0xf]
    %v325 = vld [vmem:[%s0 + $0x4] sm:$0xf]
    %v326 = vld [vmem:[%s0 + $0x8] sm:$0xf]
    %v327 = vunpack.c.l.bf16 %v324
    %v328 = vunpack.c.l.bf16 %v325
    %v329 = vunpack.c.l.bf16 %v326
    %v330 = vadd.f32 %v321, %v327
    %v331 = vadd.f32 %v322, %v328
    %v332 = vadd.f32 %v323, %v329
    %v333 = vpack.c.bf16 %v330, %v330
    %v334 = vpack.c.bf16 %v331, %v331
    %v335 = vpack.c.bf16 %v332, %v332
    %vm336 = vcmask 257024
    %337 = vst.msk [vmem:[%s7] sm:$0xf] %vm336, %v333
    %338 = vst.msk [vmem:[%s7 + $0x4] sm:$0xf] %vm336, %v334
    %339 = vst.msk [vmem:[%s7 + $0x8] sm:$0xf] %vm336, %v335
  $region37: #{_lambda_.14} parent=0 // pred_fallthru
    _
  // Predicated region
  $region38: #{_lambda_.14} parent=0 // pred_check
    _
  $region39: #{_lambda_.14} parent=0 // pred_check_branch
    %341 = sbr.rel (0) target = $region41
  $region40: #{_lambda_.14} parent=0 // pred_region
    _
  $region41: #{_lambda_.14} parent=0 // pred_fallthru
    _
  // Predicated region
  $region42: #{_lambda_.14} parent=0 // pred_check
    _
  $region43: #{_lambda_.14} parent=0 // pred_check_branch
    %343 = sbr.rel (0) target = $region45
  $region44: #{_lambda_.14} parent=0 // pred_region
    _
  $region45: #{_lambda_.14} parent=0 // pred_fallthru
    _

</llo_original>
